<compile_context>
chip_gen: v6e
topology: v6e:2x2x1
jax: 0.10.0
libtpu: 0.0.40
codegen_flags: <defaults>
</compile_context>

<pallas_src>
import jax
import jax.numpy as jnp
from jax.experimental import pallas as pl
from jax.experimental.pallas import tpu as pltpu

INPUT_SIZE = 784
HIDDEN_SIZE = 500
NUM_CLASSES = 10

HIDDEN_PAD = 512   # 500 -> 512 (lane/MXU aligned)
OUT_PAD = 128      # 10  -> 128 (lane-dense output stores)


def mlp_kernel(x_ref, w1_ref, b1_ref, w2_ref, b2_ref, o_ref):
    # fc1: (TM, 784)bf16 @ (784, 512)bf16 -> f32 accumulate on the MXU
    h = jnp.dot(x_ref[...], w1_ref[...], preferred_element_type=jnp.float32)
    # bias + ReLU epilogue in f32 (VPU filler, hidden under MXU/DMA)
    h = jnp.maximum(h + b1_ref[...], 0.0)
    # fc2: cast activations to bf16 for the MXU, accumulate in f32
    out = jnp.dot(h.astype(jnp.bfloat16), w2_ref[...],
                  preferred_element_type=jnp.float32)
    o_ref[...] = out + b2_ref[...]


def _pick_tm(batch):
    # 256-row tiles match v6e/v7x 256-wide MXU; 128 is fine for v5e and is the
    # natural choice for mid-size batches. Small batches become one padded tile
    # (multiple of 16 rows for bf16 sublane packing).
    if batch >= 256:
        return 256
    if batch >= 128:
        return 128
    return max(16, ((batch + 15) // 16) * 16)


def net_forward(x, w1, b1, w2, b2):
    """x: (B, 784) f32.  Weights in (in_features, out_features) layout,
    unpadded (784,500)/(1,500)/(500,10)/(1,10) f32.  Returns (B, 10) f32."""
    B = x.shape[0]
    tm = _pick_tm(B)
    B_pad = pl.cdiv(B, tm) * tm
    n_tiles = B_pad // tm

    # Pad + cast once in the wrapper (zero padding keeps the math identical).
    x_p = jnp.pad(x, ((0, B_pad - B), (0, 0))).astype(jnp.bfloat16)
    w1_p = jnp.pad(w1, ((0, 0), (0, HIDDEN_PAD - HIDDEN_SIZE))).astype(jnp.bfloat16)
    b1_p = jnp.pad(b1, ((0, 0), (0, HIDDEN_PAD - HIDDEN_SIZE)))            # f32
    w2_p = jnp.pad(w2, ((0, HIDDEN_PAD - HIDDEN_SIZE),
                        (0, OUT_PAD - NUM_CLASSES))).astype(jnp.bfloat16)
    b2_p = jnp.pad(b2, ((0, 0), (0, OUT_PAD - NUM_CLASSES)))               # f32

    flops = 2 * B_pad * INPUT_SIZE * HIDDEN_PAD + 2 * B_pad * HIDDEN_PAD * OUT_PAD
    bytes_accessed = (x_p.size * 2 + w1_p.size * 2 + w2_p.size * 2
                      + b1_p.size * 4 + b2_p.size * 4 + B_pad * OUT_PAD * 4)

    out_padded = pl.pallas_call(
        mlp_kernel,
        out_shape=jax.ShapeDtypeStruct((B_pad, OUT_PAD), jnp.float32),
        grid=(n_tiles,),
        in_specs=[
            pl.BlockSpec((tm, INPUT_SIZE), lambda i: (i, 0)),        # x tile
            pl.BlockSpec((INPUT_SIZE, HIDDEN_PAD), lambda i: (0, 0)),  # W1 resident
            pl.BlockSpec((1, HIDDEN_PAD), lambda i: (0, 0)),           # b1 resident
            pl.BlockSpec((HIDDEN_PAD, OUT_PAD), lambda i: (0, 0)),     # W2 resident
            pl.BlockSpec((1, OUT_PAD), lambda i: (0, 0)),              # b2 resident
        ],
        out_specs=pl.BlockSpec((tm, OUT_PAD), lambda i: (i, 0)),
        compiler_params=pltpu.CompilerParams(
            dimension_semantics=("parallel",)),
        cost_estimate=pl.CostEstimate(
            flops=flops, transcendentals=0, bytes_accessed=bytes_accessed),
    )(x_p, w1_p, b1_p, w2_p, b2_p)

    return out_padded[:B, :NUM_CLASSES]


def init_params(key):
    # Deterministic init mimicking nn.Linear default: U(-1/sqrt(fan_in), 1/sqrt(fan_in))
    k1, k2, k3, k4 = jax.random.split(key, 4)
    bound1 = 1.0 / jnp.sqrt(INPUT_SIZE)
    bound2 = 1.0 / jnp.sqrt(HIDDEN_SIZE)
    # Stored as (in_features, out_features), i.e. transposed vs torch layout.
    w1 = jax.random.uniform(k1, (INPUT_SIZE, HIDDEN_SIZE), jnp.float32, -bound1, bound1)
    b1 = jax.random.uniform(k2, (1, HIDDEN_SIZE), jnp.float32, -bound1, bound1)
    w2 = jax.random.uniform(k3, (HIDDEN_SIZE, NUM_CLASSES), jnp.float32, -bound2, bound2)
    b2 = jax.random.uniform(k4, (1, NUM_CLASSES), jnp.float32, -bound2, bound2)
    return w1, b1, w2, b2


def _reference(x, w1, b1, w2, b2):
    return jnp.maximum(x @ w1 + b1, 0.0) @ w2 + b2


if __name__ == "__main__":
    key = jax.random.PRNGKey(0)
    k_x, k_p, k_x2 = jax.random.split(key, 3)
    w1, b1, w2, b2 = init_params(k_p)

    # Small-batch case (single padded tile).
    batch = 8
    x = jax.random.normal(k_x, (batch, INPUT_SIZE), jnp.float32)
    out = net_forward(x, w1, b1, w2, b2)
    jax.block_until_ready(out)
    ref = _reference(x, w1, b1, w2, b2)
    assert out.shape == (batch, NUM_CLASSES)
    # bf16 matmul operands -> relaxed tolerance vs f32 reference.
    assert jnp.allclose(out, ref, atol=2e-2, rtol=2e-2)

    # Larger batch exercises the multi-tile pipelined grid path.
    batch2 = 256
    x2 = jax.random.normal(k_x2, (batch2, INPUT_SIZE), jnp.float32)
    out2 = net_forward(x2, w1, b1, w2, b2)
    jax.block_until_ready(out2)
    ref2 = _reference(x2, w1, b1, w2, b2)
    assert out2.shape == (batch2, NUM_CLASSES)
    assert jnp.allclose(out2, ref2, atol=2e-2, rtol=2e-2)

    print("KERNEL_OK")
</pallas_src>

<mosaic_0001>
module attributes {stable_mosaic.version = 11 : i64} {
  func.func @mlp_kernel(%arg0: i32, %arg1: memref<16x784xbf16, #tpu.memory_space<vmem>>, %arg2: memref<784x512xbf16, #tpu.memory_space<vmem>>, %arg3: memref<1x512xf32, #tpu.memory_space<vmem>>, %arg4: memref<512x128xbf16, #tpu.memory_space<vmem>>, %arg5: memref<1x128xf32, #tpu.memory_space<vmem>>, %arg6: memref<16x128xf32, #tpu.memory_space<vmem>>) attributes {dimension_semantics = [#tpu.dimension_semantics<parallel>], iteration_bounds = array<i64: 1>, scalar_prefetch = 0 : i64, scratch_operands = 0 : i64, tpu.core_type = #tpu.core_type<tc>, window_params = [{transform_indices = @transform_0, window_bounds = array<i64: 16, 784>}, {pipeline_mode = #tpu.pipeline_mode<synchronous>, transform_indices = @transform_1, window_bounds = array<i64: 784, 512>}, {pipeline_mode = #tpu.pipeline_mode<synchronous>, transform_indices = @transform_2, window_bounds = array<i64: 1, 512>}, {pipeline_mode = #tpu.pipeline_mode<synchronous>, transform_indices = @transform_3, window_bounds = array<i64: 512, 128>}, {pipeline_mode = #tpu.pipeline_mode<synchronous>, transform_indices = @transform_4, window_bounds = array<i64: 1, 128>}, {transform_indices = @transform_5, window_bounds = array<i64: 16, 128>}]} {
    %c0 = arith.constant 0 : index
    %c0_0 = arith.constant 0 : index
    %0 = vector.load %arg1[%c0, %c0_0] : memref<16x784xbf16, #tpu.memory_space<vmem>>, vector<16x784xbf16>
    %c0_1 = arith.constant 0 : index
    %c0_2 = arith.constant 0 : index
    %1 = vector.load %arg2[%c0_1, %c0_2] : memref<784x512xbf16, #tpu.memory_space<vmem>>, vector<784x512xbf16>
    %cst = arith.constant dense<0.000000e+00> : vector<16x512xf32>
    %2 = tpu.matmul %0, %1, %cst {dimension_numbers = #tpu.dot_dimension_numbers<[1], [0], [0], [1], [0, 0, 1, 1], [], []>} : vector<16x784xbf16>, vector<784x512xbf16>, vector<16x512xf32> -> vector<16x512xf32>
    %c0_3 = arith.constant 0 : index
    %c0_4 = arith.constant 0 : index
    %3 = vector.load %arg3[%c0_3, %c0_4] : memref<1x512xf32, #tpu.memory_space<vmem>>, vector<1x512xf32>
    %4 = vector.broadcast %3 : vector<1x512xf32> to vector<16x512xf32>
    %5 = arith.addf %2, %4 : vector<16x512xf32>
    %cst_5 = arith.constant 0.000000e+00 : f32
    %6 = vector.broadcast %cst_5 : f32 to vector<16x512xf32>
    %7 = arith.maximumf %5, %6 : vector<16x512xf32>
    %8 = arith.truncf %7 : vector<16x512xf32> to vector<16x512xbf16>
    %c0_6 = arith.constant 0 : index
    %c0_7 = arith.constant 0 : index
    %9 = vector.load %arg4[%c0_6, %c0_7] : memref<512x128xbf16, #tpu.memory_space<vmem>>, vector<512x128xbf16>
    %cst_8 = arith.constant dense<0.000000e+00> : vector<16x128xf32>
    %10 = tpu.matmul %8, %9, %cst_8 {dimension_numbers = #tpu.dot_dimension_numbers<[1], [0], [0], [1], [0, 0, 1, 1], [], []>} : vector<16x512xbf16>, vector<512x128xbf16>, vector<16x128xf32> -> vector<16x128xf32>
    %c0_9 = arith.constant 0 : index
    %c0_10 = arith.constant 0 : index
    %11 = vector.load %arg5[%c0_9, %c0_10] : memref<1x128xf32, #tpu.memory_space<vmem>>, vector<1x128xf32>
    %12 = vector.broadcast %11 : vector<1x128xf32> to vector<16x128xf32>
    %13 = arith.addf %10, %12 : vector<16x128xf32>
    %c0_11 = arith.constant 0 : index
    %c0_12 = arith.constant 0 : index
    %14 = vector.load %arg6[%c0_11, %c0_12] : memref<16x128xf32, #tpu.memory_space<vmem>>, vector<16x128xf32>
    tpu.vector_store %arg6[%c0_11, %c0_12], %13 {strides = array<i32>} : memref<16x128xf32, #tpu.memory_space<vmem>>, vector<16x128xf32>,
    return
  }
  func.func @transform_0(%arg0: i32) -> (i32, i32) {
    %c0_i32 = arith.constant 0 : i32
    %c0_i32_0 = arith.constant 0 : i32
    return %arg0, %c0_i32 : i32, i32
  }
  func.func @transform_1(%arg0: i32) -> (i32, i32) {
    %c0_i32 = arith.constant 0 : i32
    %c0_i32_0 = arith.constant 0 : i32
    %c0_i32_1 = arith.constant 0 : i32
    return %c0_i32, %c0_i32_0 : i32, i32
  }
  func.func @transform_2(%arg0: i32) -> (i32, i32) {
    %c0_i32 = arith.constant 0 : i32
    %c0_i32_0 = arith.constant 0 : i32
    %c0_i32_1 = arith.constant 0 : i32
    return %c0_i32, %c0_i32_0 : i32, i32
  }
  func.func @transform_3(%arg0: i32) -> (i32, i32) {
    %c0_i32 = arith.constant 0 : i32
    %c0_i32_0 = arith.constant 0 : i32
    %c0_i32_1 = arith.constant 0 : i32
    return %c0_i32, %c0_i32_0 : i32, i32
  }
  func.func @transform_4(%arg0: i32) -> (i32, i32) {
    %c0_i32 = arith.constant 0 : i32
    %c0_i32_0 = arith.constant 0 : i32
    %c0_i32_1 = arith.constant 0 : i32
    return %c0_i32, %c0_i32_0 : i32, i32
  }
  func.func @transform_5(%arg0: i32) -> (i32, i32) {
    %c0_i32 = arith.constant 0 : i32
    %c0_i32_0 = arith.constant 0 : i32
    return %arg0, %c0_i32 : i32, i32
  }
}

</mosaic_0001>

<llo_original>
// kernel: tpu_custom_call.1
$region0: #{tpu_custom_call.1}
  #allocation0 [shape = 'u32[]', space=smem, size = 0x4, offset = 0x4, fixed_abs, tag = 'smem constant byte address 0x4 - core index']
  #allocation1 [shape = 'u32[144,128]{1,0:T(1,128)}', space=vmem, size = 0x12000, scoped, tag = 'internal scratch']
  %s0 = inlined_call_operand.hbm [shape: bf16[16,784], index: 0, kind: input, shape index: {}]
  %s1 = inlined_call_operand.hbm [shape: bf16[784,512], index: 1, kind: input, shape index: {}]
  %s2 = inlined_call_operand.hbm [shape: f32[1,512], index: 2, kind: input, shape index: {}]
  %s3 = inlined_call_operand.hbm [shape: bf16[512,128], index: 3, kind: input, shape index: {}]
  %s4 = inlined_call_operand.vmem [shape: f32[1,128], index: 4, kind: input, shape index: {}]
  %s5 = inlined_call_operand.hbm [shape: f32[16,128], index: 5, kind: output, shape index: {}]
  %s6 = sld [smem:[#allocation0]]
  $region46: #{tpu_custom_call.1} parent=0
    _
  %s8 = ssub.s32 1, %s6
  %s9 = scalar_select 0, %s8, %s6
  $region1: #{tpu_custom_call.1} parent=0
    #allocation2 [shape = 'u8[28672]{0}', space=vmem, size = 0x7000, scoped, tag = 'input window, operand 0, single buffered']
    #allocation3 [shape = 's32[1]{0}', space=sflag, size = 0x4, scoped, tag = 'scoped memory for tpu_custom_call.1']
    #allocation4 [shape = 's32[1]{0}', space=sflag, size = 0x4, scoped, tag = 'scoped memory for tpu_custom_call.1']
    #allocation5 [shape = 'u8[802816]{0}', space=vmem, size = 0xc4000, scoped, tag = 'input window, operand 1, single buffered']
    #allocation6 [shape = 's32[1]{0}', space=sflag, size = 0x4, scoped, tag = 'scoped memory for tpu_custom_call.1']
    #allocation7 [shape = 'u8[2048]{0}', space=vmem, size = 0x800, scoped, tag = 'input window, operand 2, single buffered']
    #allocation8 [shape = 'u8[131072]{0}', space=vmem, size = 0x20000, scoped, tag = 'input window, operand 3, single buffered']
    #allocation9 [shape = 's32[1]{0}', space=sflag, size = 0x4, scoped, tag = 'scoped memory for tpu_custom_call.1']
    #allocation10 [shape = 'u8[8192]{0}', space=vmem, size = 0x2000, scoped, tag = 'output window, operand 0, single buffered']
    %10 = vsyncpa [#allocation3], 0
    %11 = vsyncpa [#allocation6], 0
    %12 = vsyncpa [#allocation9], 0
    %13 = vsyncpa [#allocation4], 0
    // Predicated region
    $region2: #{tpu_custom_call.1} parent=1 // pred_check
      _
    $region3: #{tpu_custom_call.1} parent=1 // pred_check_branch
      %15 = sbr.rel (0) target = $region5
    $region4: #{tpu_custom_call.1} parent=1 // pred_region
      %s17 = ssub.s32 896, 896
      %18 = vsyncadd [#allocation3], %s17
      %s19 = sshll.u32 [#allocation2], 4
      %s20 = int_to_ptr.vmem [resolvable:$true] %s19
      %25 = dma.hbm_to_vmem [thread:$0]  %s0, 896, %s20, [#allocation3], 448, 448, 28
    $region5: #{tpu_custom_call.1} parent=1 // pred_fallthru
      _
    // Predicated region
    $region6: #{tpu_custom_call.1} parent=1 // pred_check
      _
    $region7: #{tpu_custom_call.1} parent=1 // pred_check_branch
      %27 = sbr.rel (0) target = $region9
    $region8: #{tpu_custom_call.1} parent=1 // pred_region
      %s29 = ssub.s32 25088, 25088
      %30 = vsyncadd [#allocation6], %s29
      %s31 = sshll.u32 [#allocation5], 4
      %s32 = int_to_ptr.vmem [resolvable:$true] %s31
      %37 = dma.hbm_to_vmem [thread:$0]  %s1, 25088, %s32, [#allocation6], 256, 256, 16
    $region9: #{tpu_custom_call.1} parent=1 // pred_fallthru
      _
    // Predicated region
    $region10: #{tpu_custom_call.1} parent=1 // pred_check
      _
    $region11: #{tpu_custom_call.1} parent=1 // pred_check_branch
      %39 = sbr.rel (0) target = $region13
    $region12: #{tpu_custom_call.1} parent=1 // pred_region
      %s41 = ssub.s32 64, 64
      %42 = vsyncadd [#allocation6], %s41
      %s44 = sshll.u32 [#allocation7], 4
      %s45 = int_to_ptr.vmem [resolvable:$true] %s44
      %47 = dma.hbm_to_vmem [thread:$0]  %s2, 64, %s45, [#allocation6]
    $region13: #{tpu_custom_call.1} parent=1 // pred_fallthru
      _
    // Predicated region
    $region14: #{tpu_custom_call.1} parent=1 // pred_check
      _
    $region15: #{tpu_custom_call.1} parent=1 // pred_check_branch
      %49 = sbr.rel (0) target = $region17
    $region16: #{tpu_custom_call.1} parent=1 // pred_region
      %s51 = ssub.s32 4096, 4096
      %52 = vsyncadd [#allocation9], %s51
      %s53 = sshll.u32 [#allocation8], 4
      %s54 = int_to_ptr.vmem [resolvable:$true] %s53
      %59 = dma.hbm_to_vmem [thread:$0]  %s3, 4096, %s54, [#allocation9], 64, 64, 4
    $region17: #{tpu_custom_call.1} parent=1 // pred_fallthru
      _
    // Predicated region
    $region18: #{tpu_custom_call.1} parent=1 // pred_check
      _
    $region19: #{tpu_custom_call.1} parent=1 // pred_check_branch
      %61 = sbr.rel (0) target = $region21
    $region20: #{tpu_custom_call.1} parent=1 // pred_region
      _
    $region21: #{tpu_custom_call.1} parent=1 // pred_fallthru
      _
    // Predicated region
    $region22: #{tpu_custom_call.1} parent=1 // pred_check
      _
    $region23: #{tpu_custom_call.1} parent=1 // pred_check_branch
      %63 = sbr.rel (0) target = $region25
    $region24: #{tpu_custom_call.1} parent=1 // pred_region
      %64 = dma.done [#allocation3], 896
    $region25: #{tpu_custom_call.1} parent=1 // pred_fallthru
      _
    // Predicated region
    $region26: #{tpu_custom_call.1} parent=1 // pred_check
      _
    $region27: #{tpu_custom_call.1} parent=1 // pred_check_branch
      %66 = sbr.rel (0) target = $region29
    $region28: #{tpu_custom_call.1} parent=1 // pred_region
      %67 = dma.done [#allocation6], 25088
    $region29: #{tpu_custom_call.1} parent=1 // pred_fallthru
      _
    // Predicated region
    $region30: #{tpu_custom_call.1} parent=1 // pred_check
      _
    $region31: #{tpu_custom_call.1} parent=1 // pred_check_branch
      %69 = sbr.rel (0) target = $region33
    $region32: #{tpu_custom_call.1} parent=1 // pred_region
      %70 = dma.done [#allocation6], 64
    $region33: #{tpu_custom_call.1} parent=1 // pred_fallthru
      _
    // Predicated region
    $region34: #{tpu_custom_call.1} parent=1 // pred_check
      _
    $region35: #{tpu_custom_call.1} parent=1 // pred_check_branch
      %72 = sbr.rel (0) target = $region37
    $region36: #{tpu_custom_call.1} parent=1 // pred_region
      %73 = dma.done [#allocation9], 4096
    $region37: #{tpu_custom_call.1} parent=1 // pred_fallthru
      _
    %v75 = vld [vmem:[#allocation2] sm:$0xff]
    %v76 = vld [vmem:[#allocation2 + $0x8] sm:$0xff]
    %v77 = vld [vmem:[#allocation2 + $0x10] sm:$0xff]
    %v78 = vld [vmem:[#allocation2 + $0x18] sm:$0xf]
    %v79 = vld [vmem:[#allocation2 + $0x1c] sm:$0xff]
    %v80 = vld [vmem:[#allocation2 + $0x24] sm:$0xff]
    %v81 = vld [vmem:[#allocation2 + $0x2c] sm:$0xff]
    %v82 = vld [vmem:[#allocation2 + $0x34] sm:$0xf]
    %v83 = vld [vmem:[#allocation5] sm:$0xff]
    %v84 = vld [vmem:[#allocation5 + $0x8] sm:$0xff]
    %v85 = vld [vmem:[#allocation5 + $0x10] sm:$0xff]
    %v86 = vld [vmem:[#allocation5 + $0x18] sm:$0xff]
    %v87 = vld [vmem:[#allocation5 + $0x20] sm:$0xff]
    %v88 = vld [vmem:[#allocation5 + $0x28] sm:$0xff]
    %v89 = vld [vmem:[#allocation5 + $0x30] sm:$0xff]
    %v90 = vld [vmem:[#allocation5 + $0x38] sm:$0xff]
    %v91 = vld [vmem:[#allocation5 + $0x40] sm:$0xff]
    %v92 = vld [vmem:[#allocation5 + $0x48] sm:$0xff]
    %v93 = vld [vmem:[#allocation5 + $0x50] sm:$0xff]
    %v94 = vld [vmem:[#allocation5 + $0x58] sm:$0xff]
    %v95 = vld [vmem:[#allocation5 + $0x60] sm:$0xff]
    %v96 = vld [vmem:[#allocation5 + $0x68] sm:$0xff]
    %v97 = vld [vmem:[#allocation5 + $0x70] sm:$0xff]
    %v98 = vld [vmem:[#allocation5 + $0x78] sm:$0xff]
    %v99 = vld [vmem:[#allocation5 + $0x80] sm:$0xff]
    %v100 = vld [vmem:[#allocation5 + $0x88] sm:$0xff]
    %v101 = vld [vmem:[#allocation5 + $0x90] sm:$0xff]
    %v102 = vld [vmem:[#allocation5 + $0x98] sm:$0xff]
    %v103 = vld [vmem:[#allocation5 + $0xa0] sm:$0xff]
    %v104 = vld [vmem:[#allocation5 + $0xa8] sm:$0xff]
    %v105 = vld [vmem:[#allocation5 + $0xb0] sm:$0xff]
    %v106 = vld [vmem:[#allocation5 + $0xb8] sm:$0xff]
    %v107 = vld [vmem:[#allocation5 + $0xc0] sm:$0xff]
    %v108 = vld [vmem:[#allocation5 + $0xc8] sm:$0xff]
    %v109 = vld [vmem:[#allocation5 + $0xd0] sm:$0xff]
    %v110 = vld [vmem:[#allocation5 + $0xd8] sm:$0xff]
    %v111 = vld [vmem:[#allocation5 + $0xe0] sm:$0xff]
    %v112 = vld [vmem:[#allocation5 + $0xe8] sm:$0xff]
    %v113 = vld [vmem:[#allocation5 + $0xf0] sm:$0xff]
    %v114 = vld [vmem:[#allocation5 + $0xf8] sm:$0xff]
    %v115 = vld [vmem:[#allocation5 + $0x100] sm:$0xff]
    %v116 = vld [vmem:[#allocation5 + $0x108] sm:$0xff]
    %v117 = vld [vmem:[#allocation5 + $0x110] sm:$0xff]
    %v118 = vld [vmem:[#allocation5 + $0x118] sm:$0xff]
    %v119 = vld [vmem:[#allocation5 + $0x120] sm:$0xff]
    %v120 = vld [vmem:[#allocation5 + $0x128] sm:$0xff]
    %v121 = vld [vmem:[#allocation5 + $0x130] sm:$0xff]
    %v122 = vld [vmem:[#allocation5 + $0x138] sm:$0xff]
    %v123 = vld [vmem:[#allocation5 + $0x140] sm:$0xff]
    %v124 = vld [vmem:[#allocation5 + $0x148] sm:$0xff]
    %v125 = vld [vmem:[#allocation5 + $0x150] sm:$0xff]
    %v126 = vld [vmem:[#allocation5 + $0x158] sm:$0xff]
    %v127 = vld [vmem:[#allocation5 + $0x160] sm:$0xff]
    %v128 = vld [vmem:[#allocation5 + $0x168] sm:$0xff]
    %v129 = vld [vmem:[#allocation5 + $0x170] sm:$0xff]
    %v130 = vld [vmem:[#allocation5 + $0x178] sm:$0xff]
    %v131 = vld [vmem:[#allocation5 + $0x180] sm:$0xff]
    %v132 = vld [vmem:[#allocation5 + $0x188] sm:$0xff]
    %v133 = vld [vmem:[#allocation5 + $0x190] sm:$0xff]
    %v134 = vld [vmem:[#allocation5 + $0x198] sm:$0xff]
    %v135 = vld [vmem:[#allocation5 + $0x1a0] sm:$0xff]
    %v136 = vld [vmem:[#allocation5 + $0x1a8] sm:$0xff]
    %v137 = vld [vmem:[#allocation5 + $0x1b0] sm:$0xff]
    %v138 = vld [vmem:[#allocation5 + $0x1b8] sm:$0xff]
    %v139 = vld [vmem:[#allocation5 + $0x1c0] sm:$0xff]
    %v140 = vld [vmem:[#allocation5 + $0x1c8] sm:$0xff]
    %v141 = vld [vmem:[#allocation5 + $0x1d0] sm:$0xff]
    %v142 = vld [vmem:[#allocation5 + $0x1d8] sm:$0xff]
    %v143 = vld [vmem:[#allocation5 + $0x1e0] sm:$0xff]
    %v144 = vld [vmem:[#allocation5 + $0x1e8] sm:$0xff]
    %v145 = vld [vmem:[#allocation5 + $0x1f0] sm:$0xff]
    %v146 = vld [vmem:[#allocation5 + $0x1f8] sm:$0xff]
    %v147 = vld [vmem:[#allocation5 + $0x200] sm:$0xff]
    %v148 = vld [vmem:[#allocation5 + $0x208] sm:$0xff]
    %v149 = vld [vmem:[#allocation5 + $0x210] sm:$0xff]
    %v150 = vld [vmem:[#allocation5 + $0x218] sm:$0xff]
    %v151 = vld [vmem:[#allocation5 + $0x220] sm:$0xff]
    %v152 = vld [vmem:[#allocation5 + $0x228] sm:$0xff]
    %v153 = vld [vmem:[#allocation5 + $0x230] sm:$0xff]
    %v154 = vld [vmem:[#allocation5 + $0x238] sm:$0xff]
    %v155 = vld [vmem:[#allocation5 + $0x240] sm:$0xff]
    %v156 = vld [vmem:[#allocation5 + $0x248] sm:$0xff]
    %v157 = vld [vmem:[#allocation5 + $0x250] sm:$0xff]
    %v158 = vld [vmem:[#allocation5 + $0x258] sm:$0xff]
    %v159 = vld [vmem:[#allocation5 + $0x260] sm:$0xff]
    %v160 = vld [vmem:[#allocation5 + $0x268] sm:$0xff]
    %v161 = vld [vmem:[#allocation5 + $0x270] sm:$0xff]
    %v162 = vld [vmem:[#allocation5 + $0x278] sm:$0xff]
    %v163 = vld [vmem:[#allocation5 + $0x280] sm:$0xff]
    %v164 = vld [vmem:[#allocation5 + $0x288] sm:$0xff]
    %v165 = vld [vmem:[#allocation5 + $0x290] sm:$0xff]
    %v166 = vld [vmem:[#allocation5 + $0x298] sm:$0xff]
    %v167 = vld [vmem:[#allocation5 + $0x2a0] sm:$0xff]
    %v168 = vld [vmem:[#allocation5 + $0x2a8] sm:$0xff]
    %v169 = vld [vmem:[#allocation5 + $0x2b0] sm:$0xff]
    %v170 = vld [vmem:[#allocation5 + $0x2b8] sm:$0xff]
    %v171 = vld [vmem:[#allocation5 + $0x2c0] sm:$0xff]
    %v172 = vld [vmem:[#allocation5 + $0x2c8] sm:$0xff]
    %v173 = vld [vmem:[#allocation5 + $0x2d0] sm:$0xff]
    %v174 = vld [vmem:[#allocation5 + $0x2d8] sm:$0xff]
    %v175 = vld [vmem:[#allocation5 + $0x2e0] sm:$0xff]
    %v176 = vld [vmem:[#allocation5 + $0x2e8] sm:$0xff]
    %v177 = vld [vmem:[#allocation5 + $0x2f0] sm:$0xff]
    %v178 = vld [vmem:[#allocation5 + $0x2f8] sm:$0xff]
    %v179 = vld [vmem:[#allocation5 + $0x300] sm:$0xff]
    %v180 = vld [vmem:[#allocation5 + $0x308] sm:$0xff]
    %v181 = vld [vmem:[#allocation5 + $0x310] sm:$0xff]
    %v182 = vld [vmem:[#allocation5 + $0x318] sm:$0xff]
    %v183 = vld [vmem:[#allocation5 + $0x320] sm:$0xff]
    %v184 = vld [vmem:[#allocation5 + $0x328] sm:$0xff]
    %v185 = vld [vmem:[#allocation5 + $0x330] sm:$0xff]
    %v186 = vld [vmem:[#allocation5 + $0x338] sm:$0xff]
    %v187 = vld [vmem:[#allocation5 + $0x340] sm:$0xff]
    %v188 = vld [vmem:[#allocation5 + $0x348] sm:$0xff]
    %v189 = vld [vmem:[#allocation5 + $0x350] sm:$0xff]
    %v190 = vld [vmem:[#allocation5 + $0x358] sm:$0xff]
    %v191 = vld [vmem:[#allocation5 + $0x360] sm:$0xff]
    %v192 = vld [vmem:[#allocation5 + $0x368] sm:$0xff]
    %v193 = vld [vmem:[#allocation5 + $0x370] sm:$0xff]
    %v194 = vld [vmem:[#allocation5 + $0x378] sm:$0xff]
    %v195 = vld [vmem:[#allocation5 + $0x380] sm:$0xff]
    %v196 = vld [vmem:[#allocation5 + $0x388] sm:$0xff]
    %v197 = vld [vmem:[#allocation5 + $0x390] sm:$0xff]
    %v198 = vld [vmem:[#allocation5 + $0x398] sm:$0xff]
    %v199 = vld [vmem:[#allocation5 + $0x3a0] sm:$0xff]
    %v200 = vld [vmem:[#allocation5 + $0x3a8] sm:$0xff]
    %v201 = vld [vmem:[#allocation5 + $0x3b0] sm:$0xff]
    %v202 = vld [vmem:[#allocation5 + $0x3b8] sm:$0xff]
    %v203 = vld [vmem:[#allocation5 + $0x3c0] sm:$0xff]
    %v204 = vld [vmem:[#allocation5 + $0x3c8] sm:$0xff]
    %v205 = vld [vmem:[#allocation5 + $0x3d0] sm:$0xff]
    %v206 = vld [vmem:[#allocation5 + $0x3d8] sm:$0xff]
    %v207 = vld [vmem:[#allocation5 + $0x3e0] sm:$0xff]
    %v208 = vld [vmem:[#allocation5 + $0x3e8] sm:$0xff]
    %v209 = vld [vmem:[#allocation5 + $0x3f0] sm:$0xff]
    %v210 = vld [vmem:[#allocation5 + $0x3f8] sm:$0xff]
    %v211 = vld [vmem:[#allocation5 + $0x400] sm:$0xff]
    %v212 = vld [vmem:[#allocation5 + $0x408] sm:$0xff]
    %v213 = vld [vmem:[#allocation5 + $0x410] sm:$0xff]
    %v214 = vld [vmem:[#allocation5 + $0x418] sm:$0xff]
    %v215 = vld [vmem:[#allocation5 + $0x420] sm:$0xff]
    %v216 = vld [vmem:[#allocation5 + $0x428] sm:$0xff]
    %v217 = vld [vmem:[#allocation5 + $0x430] sm:$0xff]
    %v218 = vld [vmem:[#allocation5 + $0x438] sm:$0xff]
    %v219 = vld [vmem:[#allocation5 + $0x440] sm:$0xff]
    %v220 = vld [vmem:[#allocation5 + $0x448] sm:$0xff]
    %v221 = vld [vmem:[#allocation5 + $0x450] sm:$0xff]
    %v222 = vld [vmem:[#allocation5 + $0x458] sm:$0xff]
    %v223 = vld [vmem:[#allocation5 + $0x460] sm:$0xff]
    %v224 = vld [vmem:[#allocation5 + $0x468] sm:$0xff]
    %v225 = vld [vmem:[#allocation5 + $0x470] sm:$0xff]
    %v226 = vld [vmem:[#allocation5 + $0x478] sm:$0xff]
    %v227 = vld [vmem:[#allocation5 + $0x480] sm:$0xff]
    %v228 = vld [vmem:[#allocation5 + $0x488] sm:$0xff]
    %v229 = vld [vmem:[#allocation5 + $0x490] sm:$0xff]
    %v230 = vld [vmem:[#allocation5 + $0x498] sm:$0xff]
    %v231 = vld [vmem:[#allocation5 + $0x4a0] sm:$0xff]
    %v232 = vld [vmem:[#allocation5 + $0x4a8] sm:$0xff]
    %v233 = vld [vmem:[#allocation5 + $0x4b0] sm:$0xff]
    %v234 = vld [vmem:[#allocation5 + $0x4b8] sm:$0xff]
    %v235 = vld [vmem:[#allocation5 + $0x4c0] sm:$0xff]
    %v236 = vld [vmem:[#allocation5 + $0x4c8] sm:$0xff]
    %v237 = vld [vmem:[#allocation5 + $0x4d0] sm:$0xff]
    %v238 = vld [vmem:[#allocation5 + $0x4d8] sm:$0xff]
    %v239 = vld [vmem:[#allocation5 + $0x4e0] sm:$0xff]
    %v240 = vld [vmem:[#allocation5 + $0x4e8] sm:$0xff]
    %v241 = vld [vmem:[#allocation5 + $0x4f0] sm:$0xff]
    %v242 = vld [vmem:[#allocation5 + $0x4f8] sm:$0xff]
    %v243 = vld [vmem:[#allocation5 + $0x500] sm:$0xff]
    %v244 = vld [vmem:[#allocation5 + $0x508] sm:$0xff]
    %v245 = vld [vmem:[#allocation5 + $0x510] sm:$0xff]
    %v246 = vld [vmem:[#allocation5 + $0x518] sm:$0xff]
    %v247 = vld [vmem:[#allocation5 + $0x520] sm:$0xff]
    %v248 = vld [vmem:[#allocation5 + $0x528] sm:$0xff]
    %v249 = vld [vmem:[#allocation5 + $0x530] sm:$0xff]
    %v250 = vld [vmem:[#allocation5 + $0x538] sm:$0xff]
    %v251 = vld [vmem:[#allocation5 + $0x540] sm:$0xff]
    %v252 = vld [vmem:[#allocation5 + $0x548] sm:$0xff]
    %v253 = vld [vmem:[#allocation5 + $0x550] sm:$0xff]
    %v254 = vld [vmem:[#allocation5 + $0x558] sm:$0xff]
    %v255 = vld [vmem:[#allocation5 + $0x560] sm:$0xff]
    %v256 = vld [vmem:[#allocation5 + $0x568] sm:$0xff]
    %v257 = vld [vmem:[#allocation5 + $0x570] sm:$0xff]
    %v258 = vld [vmem:[#allocation5 + $0x578] sm:$0xff]
    %v259 = vld [vmem:[#allocation5 + $0x580] sm:$0xff]
    %v260 = vld [vmem:[#allocation5 + $0x588] sm:$0xff]
    %v261 = vld [vmem:[#allocation5 + $0x590] sm:$0xff]
    %v262 = vld [vmem:[#allocation5 + $0x598] sm:$0xff]
    %v263 = vld [vmem:[#allocation5 + $0x5a0] sm:$0xff]
    %v264 = vld [vmem:[#allocation5 + $0x5a8] sm:$0xff]
    %v265 = vld [vmem:[#allocation5 + $0x5b0] sm:$0xff]
    %v266 = vld [vmem:[#allocation5 + $0x5b8] sm:$0xff]
    %v267 = vld [vmem:[#allocation5 + $0x5c0] sm:$0xff]
    %v268 = vld [vmem:[#allocation5 + $0x5c8] sm:$0xff]
    %v269 = vld [vmem:[#allocation5 + $0x5d0] sm:$0xff]
    %v270 = vld [vmem:[#allocation5 + $0x5d8] sm:$0xff]
    %v271 = vld [vmem:[#allocation5 + $0x5e0] sm:$0xff]
    %v272 = vld [vmem:[#allocation5 + $0x5e8] sm:$0xff]
    %v273 = vld [vmem:[#allocation5 + $0x5f0] sm:$0xff]
    %v274 = vld [vmem:[#allocation5 + $0x5f8] sm:$0xff]
    %v275 = vld [vmem:[#allocation5 + $0x600] sm:$0xff]
    %v276 = vld [vmem:[#allocation5 + $0x608] sm:$0xff]
    %v277 = vld [vmem:[#allocation5 + $0x610] sm:$0xff]
    %v278 = vld [vmem:[#allocation5 + $0x618] sm:$0xff]
    %v279 = vld [vmem:[#allocation7] sm:$0xf]
    %v281 = vlaneseq
    %v282 = vshrl.u32 %v281, 7
    %v283 = vsub.s32 0, %v282
    %v284 = vrot.slane %v279, %v283
    %v285 = vlaneseq
    %v286 = vshrl.u32 %v285, 7
    %v287 = vsub.s32 1, %v286
    %v288 = vrot.slane %v279, %v287
    %v289 = vlaneseq
    %v290 = vshrl.u32 %v289, 7
    %v291 = vsub.s32 2, %v290
    %v292 = vrot.slane %v279, %v291
    %v293 = vlaneseq
    %v294 = vshrl.u32 %v293, 7
    %v295 = vsub.s32 3, %v294
    %v296 = vrot.slane %v279, %v295
    %v309 = vunpack.c.l.b16 %v75
    %v310 = vunpack.c.h.b16 %v75
    %v311 = vunpack.c.l.b16 %v76
    %v312 = vunpack.c.h.b16 %v76
    %v313 = vunpack.c.l.b16 %v77
    %v314 = vunpack.c.h.b16 %v77
    %v315 = vunpack.c.l.b16 %v78
    %v316 = vunpack.c.l.b16 %v79
    %v317 = vunpack.c.h.b16 %v79
    %v318 = vunpack.c.l.b16 %v80
    %v319 = vunpack.c.h.b16 %v80
    %v320 = vunpack.c.l.b16 %v81
    %v321 = vunpack.c.h.b16 %v81
    %v322 = vunpack.c.l.b16 %v82
    %v323 = vpack.c.b16 %v316, %v309
    %v324 = vpack.c.b16 %v317, %v310
    %v325 = vpack.c.b16 %v318, %v311
    %v326 = vpack.c.b16 %v319, %v312
    %v327 = vpack.c.b16 %v320, %v313
    %v328 = vpack.c.b16 %v321, %v314
    %v329 = vpack.c.b16 %v322, %v315
    %v532 = vunpack.c.l.b16 %v83
    %v533 = vunpack.c.h.b16 %v83
    %v534 = vunpack.c.l.b16 %v84
    %v535 = vunpack.c.h.b16 %v84
    %v536 = vunpack.c.l.b16 %v85
    %v537 = vunpack.c.h.b16 %v85
    %v538 = vunpack.c.l.b16 %v86
    %v539 = vunpack.c.h.b16 %v86
    %v540 = vunpack.c.l.b16 %v87
    %v541 = vunpack.c.h.b16 %v87
    %v542 = vunpack.c.l.b16 %v88
    %v543 = vunpack.c.h.b16 %v88
    %v544 = vunpack.c.l.b16 %v89
    %v545 = vunpack.c.h.b16 %v89
    %v546 = vunpack.c.l.b16 %v90
    %v547 = vunpack.c.h.b16 %v90
    %v548 = vunpack.c.l.b16 %v91
    %v549 = vunpack.c.h.b16 %v91
    %v550 = vunpack.c.l.b16 %v92
    %v551 = vunpack.c.h.b16 %v92
    %v552 = vunpack.c.l.b16 %v93
    %v553 = vunpack.c.h.b16 %v93
    %v554 = vunpack.c.l.b16 %v94
    %v555 = vunpack.c.h.b16 %v94
    %v556 = vunpack.c.l.b16 %v95
    %v557 = vunpack.c.h.b16 %v95
    %v558 = vunpack.c.l.b16 %v96
    %v559 = vunpack.c.h.b16 %v96
    %v560 = vunpack.c.l.b16 %v97
    %v561 = vunpack.c.h.b16 %v97
    %v562 = vunpack.c.l.b16 %v98
    %v563 = vunpack.c.h.b16 %v98
    %v564 = vunpack.c.l.b16 %v99
    %v565 = vunpack.c.h.b16 %v99
    %v566 = vunpack.c.l.b16 %v100
    %v567 = vunpack.c.h.b16 %v100
    %v568 = vunpack.c.l.b16 %v101
    %v569 = vunpack.c.h.b16 %v101
    %v570 = vunpack.c.l.b16 %v102
    %v571 = vunpack.c.h.b16 %v102
    %v572 = vunpack.c.l.b16 %v103
    %v573 = vunpack.c.h.b16 %v103
    %v574 = vunpack.c.l.b16 %v104
    %v575 = vunpack.c.h.b16 %v104
    %v576 = vunpack.c.l.b16 %v105
    %v577 = vunpack.c.h.b16 %v105
    %v578 = vunpack.c.l.b16 %v106
    %v579 = vunpack.c.h.b16 %v106
    %v580 = vunpack.c.l.b16 %v107
    %v581 = vunpack.c.h.b16 %v107
    %v582 = vunpack.c.l.b16 %v108
    %v583 = vunpack.c.h.b16 %v108
    %v584 = vunpack.c.l.b16 %v109
    %v585 = vunpack.c.h.b16 %v109
    %v586 = vunpack.c.l.b16 %v110
    %v587 = vunpack.c.h.b16 %v110
    %v588 = vunpack.c.l.b16 %v111
    %v589 = vunpack.c.h.b16 %v111
    %v590 = vunpack.c.l.b16 %v112
    %v591 = vunpack.c.h.b16 %v112
    %v592 = vunpack.c.l.b16 %v113
    %v593 = vunpack.c.h.b16 %v113
    %v594 = vunpack.c.l.b16 %v114
    %v595 = vunpack.c.h.b16 %v114
    %v596 = vunpack.c.l.b16 %v115
    %v597 = vunpack.c.h.b16 %v115
    %v598 = vunpack.c.l.b16 %v116
    %v599 = vunpack.c.h.b16 %v116
    %v600 = vunpack.c.l.b16 %v117
    %v601 = vunpack.c.h.b16 %v117
    %v602 = vunpack.c.l.b16 %v118
    %v603 = vunpack.c.h.b16 %v118
    %v604 = vunpack.c.l.b16 %v119
    %v605 = vunpack.c.h.b16 %v119
    %v606 = vunpack.c.l.b16 %v120
    %v607 = vunpack.c.h.b16 %v120
    %v608 = vunpack.c.l.b16 %v121
    %v609 = vunpack.c.h.b16 %v121
    %v610 = vunpack.c.l.b16 %v122
    %v611 = vunpack.c.h.b16 %v122
    %v612 = vunpack.c.l.b16 %v123
    %v613 = vunpack.c.h.b16 %v123
    %v614 = vunpack.c.l.b16 %v124
    %v615 = vunpack.c.h.b16 %v124
    %v616 = vunpack.c.l.b16 %v125
    %v617 = vunpack.c.h.b16 %v125
    %v618 = vunpack.c.l.b16 %v126
    %v619 = vunpack.c.h.b16 %v126
    %v620 = vunpack.c.l.b16 %v127
    %v621 = vunpack.c.h.b16 %v127
    %v622 = vunpack.c.l.b16 %v128
    %v623 = vunpack.c.h.b16 %v128
    %v624 = vunpack.c.l.b16 %v129
    %v625 = vunpack.c.h.b16 %v129
    %v626 = vunpack.c.l.b16 %v130
    %v627 = vunpack.c.h.b16 %v130
    %v628 = vunpack.c.l.b16 %v131
    %v629 = vunpack.c.h.b16 %v131
    %v630 = vunpack.c.l.b16 %v132
    %v631 = vunpack.c.h.b16 %v132
    %v632 = vunpack.c.l.b16 %v133
    %v633 = vunpack.c.h.b16 %v133
    %v634 = vunpack.c.l.b16 %v134
    %v635 = vunpack.c.h.b16 %v134
    %v636 = vunpack.c.l.b16 %v135
    %v637 = vunpack.c.h.b16 %v135
    %v638 = vunpack.c.l.b16 %v136
    %v639 = vunpack.c.h.b16 %v136
    %v640 = vunpack.c.l.b16 %v137
    %v641 = vunpack.c.h.b16 %v137
    %v642 = vunpack.c.l.b16 %v138
    %v643 = vunpack.c.h.b16 %v138
    %v644 = vunpack.c.l.b16 %v139
    %v645 = vunpack.c.h.b16 %v139
    %v646 = vunpack.c.l.b16 %v140
    %v647 = vunpack.c.h.b16 %v140
    %v648 = vunpack.c.l.b16 %v141
    %v649 = vunpack.c.h.b16 %v141
    %v650 = vunpack.c.l.b16 %v142
    %v651 = vunpack.c.h.b16 %v142
    %v652 = vunpack.c.l.b16 %v143
    %v653 = vunpack.c.h.b16 %v143
    %v654 = vunpack.c.l.b16 %v144
    %v655 = vunpack.c.h.b16 %v144
    %v656 = vunpack.c.l.b16 %v145
    %v657 = vunpack.c.h.b16 %v145
    %v658 = vunpack.c.l.b16 %v146
    %v659 = vunpack.c.h.b16 %v146
    %v660 = vunpack.c.l.b16 %v147
    %v661 = vunpack.c.h.b16 %v147
    %v662 = vunpack.c.l.b16 %v148
    %v663 = vunpack.c.h.b16 %v148
    %v664 = vunpack.c.l.b16 %v149
    %v665 = vunpack.c.h.b16 %v149
    %v666 = vunpack.c.l.b16 %v150
    %v667 = vunpack.c.h.b16 %v150
    %v668 = vunpack.c.l.b16 %v151
    %v669 = vunpack.c.h.b16 %v151
    %v670 = vunpack.c.l.b16 %v152
    %v671 = vunpack.c.h.b16 %v152
    %v672 = vunpack.c.l.b16 %v153
    %v673 = vunpack.c.h.b16 %v153
    %v674 = vunpack.c.l.b16 %v154
    %v675 = vunpack.c.h.b16 %v154
    %v676 = vunpack.c.l.b16 %v155
    %v677 = vunpack.c.h.b16 %v155
    %v678 = vunpack.c.l.b16 %v156
    %v679 = vunpack.c.h.b16 %v156
    %v680 = vunpack.c.l.b16 %v157
    %v681 = vunpack.c.h.b16 %v157
    %v682 = vunpack.c.l.b16 %v158
    %v683 = vunpack.c.h.b16 %v158
    %v684 = vunpack.c.l.b16 %v159
    %v685 = vunpack.c.h.b16 %v159
    %v686 = vunpack.c.l.b16 %v160
    %v687 = vunpack.c.h.b16 %v160
    %v688 = vunpack.c.l.b16 %v161
    %v689 = vunpack.c.h.b16 %v161
    %v690 = vunpack.c.l.b16 %v162
    %v691 = vunpack.c.h.b16 %v162
    %v692 = vunpack.c.l.b16 %v163
    %v693 = vunpack.c.h.b16 %v163
    %v694 = vunpack.c.l.b16 %v164
    %v695 = vunpack.c.h.b16 %v164
    %v696 = vunpack.c.l.b16 %v165
    %v697 = vunpack.c.h.b16 %v165
    %v698 = vunpack.c.l.b16 %v166
    %v699 = vunpack.c.h.b16 %v166
    %v700 = vunpack.c.l.b16 %v167
    %v701 = vunpack.c.h.b16 %v167
    %v702 = vunpack.c.l.b16 %v168
    %v703 = vunpack.c.h.b16 %v168
    %v704 = vunpack.c.l.b16 %v169
    %v705 = vunpack.c.h.b16 %v169
    %v706 = vunpack.c.l.b16 %v170
    %v707 = vunpack.c.h.b16 %v170
    %v708 = vunpack.c.l.b16 %v171
    %v709 = vunpack.c.h.b16 %v171
    %v710 = vunpack.c.l.b16 %v172
    %v711 = vunpack.c.h.b16 %v172
    %v712 = vunpack.c.l.b16 %v173
    %v713 = vunpack.c.h.b16 %v173
    %v714 = vunpack.c.l.b16 %v174
    %v715 = vunpack.c.h.b16 %v174
    %v716 = vunpack.c.l.b16 %v175
    %v717 = vunpack.c.h.b16 %v175
    %v718 = vunpack.c.l.b16 %v176
    %v719 = vunpack.c.h.b16 %v176
    %v720 = vunpack.c.l.b16 %v177
    %v721 = vunpack.c.h.b16 %v177
    %v722 = vunpack.c.l.b16 %v178
    %v723 = vunpack.c.h.b16 %v178
    %v724 = vunpack.c.l.b16 %v179
    %v725 = vunpack.c.h.b16 %v179
    %v726 = vunpack.c.l.b16 %v180
    %v727 = vunpack.c.h.b16 %v180
    %v728 = vunpack.c.l.b16 %v181
    %v729 = vunpack.c.h.b16 %v181
    %v730 = vunpack.c.l.b16 %v182
    %v731 = vunpack.c.h.b16 %v182
    %v732 = vunpack.c.l.b16 %v183
    %v733 = vunpack.c.h.b16 %v183
    %v734 = vunpack.c.l.b16 %v184
    %v735 = vunpack.c.h.b16 %v184
    %v736 = vunpack.c.l.b16 %v185
    %v737 = vunpack.c.h.b16 %v185
    %v738 = vunpack.c.l.b16 %v186
    %v739 = vunpack.c.h.b16 %v186
    %v740 = vunpack.c.l.b16 %v187
    %v741 = vunpack.c.h.b16 %v187
    %v742 = vunpack.c.l.b16 %v188
    %v743 = vunpack.c.h.b16 %v188
    %v744 = vunpack.c.l.b16 %v189
    %v745 = vunpack.c.h.b16 %v189
    %v746 = vunpack.c.l.b16 %v190
    %v747 = vunpack.c.h.b16 %v190
    %v748 = vunpack.c.l.b16 %v191
    %v749 = vunpack.c.h.b16 %v191
    %v750 = vunpack.c.l.b16 %v192
    %v751 = vunpack.c.h.b16 %v192
    %v752 = vunpack.c.l.b16 %v193
    %v753 = vunpack.c.h.b16 %v193
    %v754 = vunpack.c.l.b16 %v194
    %v755 = vunpack.c.h.b16 %v194
    %v756 = vunpack.c.l.b16 %v195
    %v757 = vunpack.c.h.b16 %v195
    %v758 = vunpack.c.l.b16 %v196
    %v759 = vunpack.c.h.b16 %v196
    %v760 = vunpack.c.l.b16 %v197
    %v761 = vunpack.c.h.b16 %v197
    %v762 = vunpack.c.l.b16 %v198
    %v763 = vunpack.c.h.b16 %v198
    %v764 = vunpack.c.l.b16 %v199
    %v765 = vunpack.c.h.b16 %v199
    %v766 = vunpack.c.l.b16 %v200
    %v767 = vunpack.c.h.b16 %v200
    %v768 = vunpack.c.l.b16 %v201
    %v769 = vunpack.c.h.b16 %v201
    %v770 = vunpack.c.l.b16 %v202
    %v771 = vunpack.c.h.b16 %v202
    %v772 = vunpack.c.l.b16 %v203
    %v773 = vunpack.c.h.b16 %v203
    %v774 = vunpack.c.l.b16 %v204
    %v775 = vunpack.c.h.b16 %v204
    %v776 = vunpack.c.l.b16 %v205
    %v777 = vunpack.c.h.b16 %v205
    %v778 = vunpack.c.l.b16 %v206
    %v779 = vunpack.c.h.b16 %v206
    %v780 = vunpack.c.l.b16 %v207
    %v781 = vunpack.c.h.b16 %v207
    %v782 = vunpack.c.l.b16 %v208
    %v783 = vunpack.c.h.b16 %v208
    %v784 = vunpack.c.l.b16 %v209
    %v785 = vunpack.c.h.b16 %v209
    %v786 = vunpack.c.l.b16 %v210
    %v787 = vunpack.c.h.b16 %v210
    %v788 = vunpack.c.l.b16 %v211
    %v789 = vunpack.c.h.b16 %v211
    %v790 = vunpack.c.l.b16 %v212
    %v791 = vunpack.c.h.b16 %v212
    %v792 = vunpack.c.l.b16 %v213
    %v793 = vunpack.c.h.b16 %v213
    %v794 = vunpack.c.l.b16 %v214
    %v795 = vunpack.c.h.b16 %v214
    %v796 = vunpack.c.l.b16 %v215
    %v797 = vunpack.c.h.b16 %v215
    %v798 = vunpack.c.l.b16 %v216
    %v799 = vunpack.c.h.b16 %v216
    %v800 = vunpack.c.l.b16 %v217
    %v801 = vunpack.c.h.b16 %v217
    %v802 = vunpack.c.l.b16 %v218
    %v803 = vunpack.c.h.b16 %v218
    %v804 = vunpack.c.l.b16 %v219
    %v805 = vunpack.c.h.b16 %v219
    %v806 = vunpack.c.l.b16 %v220
    %v807 = vunpack.c.h.b16 %v220
    %v808 = vunpack.c.l.b16 %v221
    %v809 = vunpack.c.h.b16 %v221
    %v810 = vunpack.c.l.b16 %v222
    %v811 = vunpack.c.h.b16 %v222
    %v812 = vunpack.c.l.b16 %v223
    %v813 = vunpack.c.h.b16 %v223
    %v814 = vunpack.c.l.b16 %v224
    %v815 = vunpack.c.h.b16 %v224
    %v816 = vunpack.c.l.b16 %v225
    %v817 = vunpack.c.h.b16 %v225
    %v818 = vunpack.c.l.b16 %v226
    %v819 = vunpack.c.h.b16 %v226
    %v820 = vunpack.c.l.b16 %v227
    %v821 = vunpack.c.h.b16 %v227
    %v822 = vunpack.c.l.b16 %v228
    %v823 = vunpack.c.h.b16 %v228
    %v824 = vunpack.c.l.b16 %v229
    %v825 = vunpack.c.h.b16 %v229
    %v826 = vunpack.c.l.b16 %v230
    %v827 = vunpack.c.h.b16 %v230
    %v828 = vunpack.c.l.b16 %v231
    %v829 = vunpack.c.h.b16 %v231
    %v830 = vunpack.c.l.b16 %v232
    %v831 = vunpack.c.h.b16 %v232
    %v832 = vunpack.c.l.b16 %v233
    %v833 = vunpack.c.h.b16 %v233
    %v834 = vunpack.c.l.b16 %v234
    %v835 = vunpack.c.h.b16 %v234
    %v836 = vunpack.c.l.b16 %v235
    %v837 = vunpack.c.h.b16 %v235
    %v838 = vunpack.c.l.b16 %v236
    %v839 = vunpack.c.h.b16 %v236
    %v840 = vunpack.c.l.b16 %v237
    %v841 = vunpack.c.h.b16 %v237
    %v842 = vunpack.c.l.b16 %v238
    %v843 = vunpack.c.h.b16 %v238
    %v844 = vunpack.c.l.b16 %v239
    %v845 = vunpack.c.h.b16 %v239
    %v846 = vunpack.c.l.b16 %v240
    %v847 = vunpack.c.h.b16 %v240
    %v848 = vunpack.c.l.b16 %v241
    %v849 = vunpack.c.h.b16 %v241
    %v850 = vunpack.c.l.b16 %v242
    %v851 = vunpack.c.h.b16 %v242
    %v852 = vunpack.c.l.b16 %v243
    %v853 = vunpack.c.h.b16 %v243
    %v854 = vunpack.c.l.b16 %v244
    %v855 = vunpack.c.h.b16 %v244
    %v856 = vunpack.c.l.b16 %v245
    %v857 = vunpack.c.h.b16 %v245
    %v858 = vunpack.c.l.b16 %v246
    %v859 = vunpack.c.h.b16 %v246
    %v860 = vunpack.c.l.b16 %v247
    %v861 = vunpack.c.h.b16 %v247
    %v862 = vunpack.c.l.b16 %v248
    %v863 = vunpack.c.h.b16 %v248
    %v864 = vunpack.c.l.b16 %v249
    %v865 = vunpack.c.h.b16 %v249
    %v866 = vunpack.c.l.b16 %v250
    %v867 = vunpack.c.h.b16 %v250
    %v868 = vunpack.c.l.b16 %v251
    %v869 = vunpack.c.h.b16 %v251
    %v870 = vunpack.c.l.b16 %v252
    %v871 = vunpack.c.h.b16 %v252
    %v872 = vunpack.c.l.b16 %v253
    %v873 = vunpack.c.h.b16 %v253
    %v874 = vunpack.c.l.b16 %v254
    %v875 = vunpack.c.h.b16 %v254
    %v876 = vunpack.c.l.b16 %v255
    %v877 = vunpack.c.h.b16 %v255
    %v878 = vunpack.c.l.b16 %v256
    %v879 = vunpack.c.h.b16 %v256
    %v880 = vunpack.c.l.b16 %v257
    %v881 = vunpack.c.h.b16 %v257
    %v882 = vunpack.c.l.b16 %v258
    %v883 = vunpack.c.h.b16 %v258
    %v884 = vunpack.c.l.b16 %v259
    %v885 = vunpack.c.h.b16 %v259
    %v886 = vunpack.c.l.b16 %v260
    %v887 = vunpack.c.h.b16 %v260
    %v888 = vunpack.c.l.b16 %v261
    %v889 = vunpack.c.h.b16 %v261
    %v890 = vunpack.c.l.b16 %v262
    %v891 = vunpack.c.h.b16 %v262
    %v892 = vunpack.c.l.b16 %v263
    %v893 = vunpack.c.h.b16 %v263
    %v894 = vunpack.c.l.b16 %v264
    %v895 = vunpack.c.h.b16 %v264
    %v896 = vunpack.c.l.b16 %v265
    %v897 = vunpack.c.h.b16 %v265
    %v898 = vunpack.c.l.b16 %v266
    %v899 = vunpack.c.h.b16 %v266
    %v900 = vunpack.c.l.b16 %v267
    %v901 = vunpack.c.h.b16 %v267
    %v902 = vunpack.c.l.b16 %v268
    %v903 = vunpack.c.h.b16 %v268
    %v904 = vunpack.c.l.b16 %v269
    %v905 = vunpack.c.h.b16 %v269
    %v906 = vunpack.c.l.b16 %v270
    %v907 = vunpack.c.h.b16 %v270
    %v908 = vunpack.c.l.b16 %v271
    %v909 = vunpack.c.h.b16 %v271
    %v910 = vunpack.c.l.b16 %v272
    %v911 = vunpack.c.h.b16 %v272
    %v912 = vunpack.c.l.b16 %v273
    %v913 = vunpack.c.h.b16 %v273
    %v914 = vunpack.c.l.b16 %v274
    %v915 = vunpack.c.h.b16 %v274
    %v916 = vunpack.c.l.b16 %v275
    %v917 = vunpack.c.h.b16 %v275
    %v918 = vunpack.c.l.b16 %v276
    %v919 = vunpack.c.h.b16 %v276
    %v920 = vunpack.c.l.b16 %v277
    %v921 = vunpack.c.h.b16 %v277
    %v922 = vunpack.c.l.b16 %v278
    %v923 = vunpack.c.h.b16 %v278
    %v924 = vpack.c.b16 %v536, %v532
    %v925 = vpack.c.b16 %v537, %v533
    %v926 = vpack.c.b16 %v538, %v534
    %v927 = vpack.c.b16 %v539, %v535
    %v928 = vpack.c.b16 %v544, %v540
    %v929 = vpack.c.b16 %v545, %v541
    %v930 = vpack.c.b16 %v546, %v542
    %v931 = vpack.c.b16 %v547, %v543
    %v932 = vpack.c.b16 %v552, %v548
    %v933 = vpack.c.b16 %v553, %v549
    %v934 = vpack.c.b16 %v554, %v550
    %v935 = vpack.c.b16 %v555, %v551
    %v936 = vpack.c.b16 %v560, %v556
    %v937 = vpack.c.b16 %v561, %v557
    %v938 = vpack.c.b16 %v562, %v558
    %v939 = vpack.c.b16 %v563, %v559
    %v940 = vpack.c.b16 %v568, %v564
    %v941 = vpack.c.b16 %v569, %v565
    %v942 = vpack.c.b16 %v570, %v566
    %v943 = vpack.c.b16 %v571, %v567
    %v944 = vpack.c.b16 %v576, %v572
    %v945 = vpack.c.b16 %v577, %v573
    %v946 = vpack.c.b16 %v578, %v574
    %v947 = vpack.c.b16 %v579, %v575
    %v948 = vpack.c.b16 %v584, %v580
    %v949 = vpack.c.b16 %v585, %v581
    %v950 = vpack.c.b16 %v586, %v582
    %v951 = vpack.c.b16 %v587, %v583
    %v952 = vpack.c.b16 %v592, %v588
    %v953 = vpack.c.b16 %v593, %v589
    %v954 = vpack.c.b16 %v594, %v590
    %v955 = vpack.c.b16 %v595, %v591
    %v956 = vpack.c.b16 %v600, %v596
    %v957 = vpack.c.b16 %v601, %v597
    %v958 = vpack.c.b16 %v602, %v598
    %v959 = vpack.c.b16 %v603, %v599
    %v960 = vpack.c.b16 %v608, %v604
    %v961 = vpack.c.b16 %v609, %v605
    %v962 = vpack.c.b16 %v610, %v606
    %v963 = vpack.c.b16 %v611, %v607
    %v964 = vpack.c.b16 %v616, %v612
    %v965 = vpack.c.b16 %v617, %v613
    %v966 = vpack.c.b16 %v618, %v614
    %v967 = vpack.c.b16 %v619, %v615
    %v968 = vpack.c.b16 %v624, %v620
    %v969 = vpack.c.b16 %v625, %v621
    %v970 = vpack.c.b16 %v626, %v622
    %v971 = vpack.c.b16 %v627, %v623
    %v972 = vpack.c.b16 %v632, %v628
    %v973 = vpack.c.b16 %v633, %v629
    %v974 = vpack.c.b16 %v634, %v630
    %v975 = vpack.c.b16 %v635, %v631
    %v976 = vpack.c.b16 %v640, %v636
    %v977 = vpack.c.b16 %v641, %v637
    %v978 = vpack.c.b16 %v642, %v638
    %v979 = vpack.c.b16 %v643, %v639
    %v980 = vpack.c.b16 %v648, %v644
    %v981 = vpack.c.b16 %v649, %v645
    %v982 = vpack.c.b16 %v650, %v646
    %v983 = vpack.c.b16 %v651, %v647
    %v984 = vpack.c.b16 %v656, %v652
    %v985 = vpack.c.b16 %v657, %v653
    %v986 = vpack.c.b16 %v658, %v654
    %v987 = vpack.c.b16 %v659, %v655
    %v988 = vpack.c.b16 %v664, %v660
    %v989 = vpack.c.b16 %v665, %v661
    %v990 = vpack.c.b16 %v666, %v662
    %v991 = vpack.c.b16 %v667, %v663
    %v992 = vpack.c.b16 %v672, %v668
    %v993 = vpack.c.b16 %v673, %v669
    %v994 = vpack.c.b16 %v674, %v670
    %v995 = vpack.c.b16 %v675, %v671
    %v996 = vpack.c.b16 %v680, %v676
    %v997 = vpack.c.b16 %v681, %v677
    %v998 = vpack.c.b16 %v682, %v678
    %v999 = vpack.c.b16 %v683, %v679
    %v1000 = vpack.c.b16 %v688, %v684
    %v1001 = vpack.c.b16 %v689, %v685
    %v1002 = vpack.c.b16 %v690, %v686
    %v1003 = vpack.c.b16 %v691, %v687
    %v1004 = vpack.c.b16 %v696, %v692
    %v1005 = vpack.c.b16 %v697, %v693
    %v1006 = vpack.c.b16 %v698, %v694
    %v1007 = vpack.c.b16 %v699, %v695
    %v1008 = vpack.c.b16 %v704, %v700
    %v1009 = vpack.c.b16 %v705, %v701
    %v1010 = vpack.c.b16 %v706, %v702
    %v1011 = vpack.c.b16 %v707, %v703
    %v1012 = vpack.c.b16 %v712, %v708
    %v1013 = vpack.c.b16 %v713, %v709
    %v1014 = vpack.c.b16 %v714, %v710
    %v1015 = vpack.c.b16 %v715, %v711
    %v1016 = vpack.c.b16 %v720, %v716
    %v1017 = vpack.c.b16 %v721, %v717
    %v1018 = vpack.c.b16 %v722, %v718
    %v1019 = vpack.c.b16 %v723, %v719
    %v1020 = vpack.c.b16 %v728, %v724
    %v1021 = vpack.c.b16 %v729, %v725
    %v1022 = vpack.c.b16 %v730, %v726
    %v1023 = vpack.c.b16 %v731, %v727
    %v1024 = vpack.c.b16 %v736, %v732
    %v1025 = vpack.c.b16 %v737, %v733
    %v1026 = vpack.c.b16 %v738, %v734
    %v1027 = vpack.c.b16 %v739, %v735
    %v1028 = vpack.c.b16 %v744, %v740
    %v1029 = vpack.c.b16 %v745, %v741
    %v1030 = vpack.c.b16 %v746, %v742
    %v1031 = vpack.c.b16 %v747, %v743
    %v1032 = vpack.c.b16 %v752, %v748
    %v1033 = vpack.c.b16 %v753, %v749
    %v1034 = vpack.c.b16 %v754, %v750
    %v1035 = vpack.c.b16 %v755, %v751
    %v1036 = vpack.c.b16 %v760, %v756
    %v1037 = vpack.c.b16 %v761, %v757
    %v1038 = vpack.c.b16 %v762, %v758
    %v1039 = vpack.c.b16 %v763, %v759
    %v1040 = vpack.c.b16 %v768, %v764
    %v1041 = vpack.c.b16 %v769, %v765
    %v1042 = vpack.c.b16 %v770, %v766
    %v1043 = vpack.c.b16 %v771, %v767
    %v1044 = vpack.c.b16 %v776, %v772
    %v1045 = vpack.c.b16 %v777, %v773
    %v1046 = vpack.c.b16 %v778, %v774
    %v1047 = vpack.c.b16 %v779, %v775
    %v1048 = vpack.c.b16 %v784, %v780
    %v1049 = vpack.c.b16 %v785, %v781
    %v1050 = vpack.c.b16 %v786, %v782
    %v1051 = vpack.c.b16 %v787, %v783
    %v1052 = vpack.c.b16 %v792, %v788
    %v1053 = vpack.c.b16 %v793, %v789
    %v1054 = vpack.c.b16 %v794, %v790
    %v1055 = vpack.c.b16 %v795, %v791
    %v1056 = vpack.c.b16 %v800, %v796
    %v1057 = vpack.c.b16 %v801, %v797
    %v1058 = vpack.c.b16 %v802, %v798
    %v1059 = vpack.c.b16 %v803, %v799
    %v1060 = vpack.c.b16 %v808, %v804
    %v1061 = vpack.c.b16 %v809, %v805
    %v1062 = vpack.c.b16 %v810, %v806
    %v1063 = vpack.c.b16 %v811, %v807
    %v1064 = vpack.c.b16 %v816, %v812
    %v1065 = vpack.c.b16 %v817, %v813
    %v1066 = vpack.c.b16 %v818, %v814
    %v1067 = vpack.c.b16 %v819, %v815
    %v1068 = vpack.c.b16 %v824, %v820
    %v1069 = vpack.c.b16 %v825, %v821
    %v1070 = vpack.c.b16 %v826, %v822
    %v1071 = vpack.c.b16 %v827, %v823
    %v1072 = vpack.c.b16 %v832, %v828
    %v1073 = vpack.c.b16 %v833, %v829
    %v1074 = vpack.c.b16 %v834, %v830
    %v1075 = vpack.c.b16 %v835, %v831
    %v1076 = vpack.c.b16 %v840, %v836
    %v1077 = vpack.c.b16 %v841, %v837
    %v1078 = vpack.c.b16 %v842, %v838
    %v1079 = vpack.c.b16 %v843, %v839
    %v1080 = vpack.c.b16 %v848, %v844
    %v1081 = vpack.c.b16 %v849, %v845
    %v1082 = vpack.c.b16 %v850, %v846
    %v1083 = vpack.c.b16 %v851, %v847
    %v1084 = vpack.c.b16 %v856, %v852
    %v1085 = vpack.c.b16 %v857, %v853
    %v1086 = vpack.c.b16 %v858, %v854
    %v1087 = vpack.c.b16 %v859, %v855
    %v1088 = vpack.c.b16 %v864, %v860
    %v1089 = vpack.c.b16 %v865, %v861
    %v1090 = vpack.c.b16 %v866, %v862
    %v1091 = vpack.c.b16 %v867, %v863
    %v1092 = vpack.c.b16 %v872, %v868
    %v1093 = vpack.c.b16 %v873, %v869
    %v1094 = vpack.c.b16 %v874, %v870
    %v1095 = vpack.c.b16 %v875, %v871
    %v1096 = vpack.c.b16 %v880, %v876
    %v1097 = vpack.c.b16 %v881, %v877
    %v1098 = vpack.c.b16 %v882, %v878
    %v1099 = vpack.c.b16 %v883, %v879
    %v1100 = vpack.c.b16 %v888, %v884
    %v1101 = vpack.c.b16 %v889, %v885
    %v1102 = vpack.c.b16 %v890, %v886
    %v1103 = vpack.c.b16 %v891, %v887
    %v1104 = vpack.c.b16 %v896, %v892
    %v1105 = vpack.c.b16 %v897, %v893
    %v1106 = vpack.c.b16 %v898, %v894
    %v1107 = vpack.c.b16 %v899, %v895
    %v1108 = vpack.c.b16 %v904, %v900
    %v1109 = vpack.c.b16 %v905, %v901
    %v1110 = vpack.c.b16 %v906, %v902
    %v1111 = vpack.c.b16 %v907, %v903
    %v1112 = vpack.c.b16 %v912, %v908
    %v1113 = vpack.c.b16 %v913, %v909
    %v1114 = vpack.c.b16 %v914, %v910
    %v1115 = vpack.c.b16 %v915, %v911
    %v1116 = vpack.c.b16 %v920, %v916
    %v1117 = vpack.c.b16 %v921, %v917
    %v1118 = vpack.c.b16 %v922, %v918
    %v1119 = vpack.c.b16 %v923, %v919
    %vm1316 = vcmask 130048
    %v1318 = vsel %vm1316, %v329, 0
    %1320 = vmatprep.subr.bf16.mxu0 %v953
    %1321 = vmatpush1.bf16.msra.mxu0 %v952
    %1322 = vmatprep.subr.bf16.mxu0 %v949
    %1323 = vmatpush1.bf16.msra.mxu0 %v948
    %1324 = vmatprep.subr.bf16.mxu0 %v945
    %1325 = vmatpush1.bf16.msra.mxu0 %v944
    %1326 = vmatprep.subr.bf16.mxu0 %v941
    %1327 = vmatpush1.bf16.msra.mxu0 %v940
    %1328 = vmatprep.subr.bf16.mxu0 %v937
    %1329 = vmatpush1.bf16.msra.mxu0 %v936
    %1330 = vmatprep.subr.bf16.mxu0 %v933
    %1331 = vmatpush1.bf16.msra.mxu0 %v932
    %1332 = vmatprep.subr.bf16.mxu0 %v929
    %1333 = vmatpush1.bf16.msra.mxu0 %v928
    %1334 = vmatprep.subr.bf16.mxu0 %v925
    %1335 = vmatpush1.bf16.msra.mxu0 %v924
    %1336 = vmatprep.subr.bf16.mxu0 %v985
    %1337 = vmatpush2.bf16.msra.mxu0 %v984
    %1338 = vmatprep.subr.bf16.mxu0 %v981
    %1339 = vmatpush2.bf16.msra.mxu0 %v980
    %1340 = vmatprep.subr.bf16.mxu0 %v977
    %1341 = vmatpush2.bf16.msra.mxu0 %v976
    %1342 = vmatprep.subr.bf16.mxu0 %v973
    %1343 = vmatpush2.bf16.msra.mxu0 %v972
    %1344 = vmatprep.subr.bf16.mxu0 %v969
    %1345 = vmatpush2.bf16.msra.mxu0 %v968
    %1346 = vmatprep.subr.bf16.mxu0 %v965
    %1347 = vmatpush2.bf16.msra.mxu0 %v964
    %1348 = vmatprep.subr.bf16.mxu0 %v961
    %1349 = vmatpush2.bf16.msra.mxu0 %v960
    %1350 = vmatprep.subr.bf16.mxu0 %v957
    %1351 = vmatpush2.bf16.msra.mxu0 %v956
    %1352 = vmatprep.mubr.bf16.mxu0 %v324
    %1353 = vmatmul.mubr.bf16.gmra.mxu0 %v323
    %v1354 = vpop.f32.mrf.mxu0
    %v1355 = vadd.f32 %v284, %v1354
    %v1356 = vpop.f32.mrf.mxu0
    %v1357 = vadd.f32 %v288, %v1356
    %v1358 = vpop.f32.mrf.mxu0
    %v1359 = vadd.f32 %v284, %v1358
    %v1360 = vpop.f32.mrf.mxu0
    %v1361 = vadd.f32 %v288, %v1360
    %1362 = vdwg.mxu0
    %1363 = vmatprep.subr.bf16.mxu0 %v1017
    %1364 = vmatpush1.bf16.msra.mxu0 %v1016
    %1365 = vmatprep.subr.bf16.mxu0 %v1013
    %1366 = vmatpush1.bf16.msra.mxu0 %v1012
    %1367 = vmatprep.subr.bf16.mxu0 %v1009
    %1368 = vmatpush1.bf16.msra.mxu0 %v1008
    %1369 = vmatprep.subr.bf16.mxu0 %v1005
    %1370 = vmatpush1.bf16.msra.mxu0 %v1004
    %1371 = vmatprep.subr.bf16.mxu0 %v1001
    %1372 = vmatpush1.bf16.msra.mxu0 %v1000
    %1373 = vmatprep.subr.bf16.mxu0 %v997
    %1374 = vmatpush1.bf16.msra.mxu0 %v996
    %1375 = vmatprep.subr.bf16.mxu0 %v993
    %1376 = vmatpush1.bf16.msra.mxu0 %v992
    %1377 = vmatprep.subr.bf16.mxu0 %v989
    %1378 = vmatpush1.bf16.msra.mxu0 %v988
    %1379 = vmatprep.subr.bf16.mxu0 %v1049
    %1380 = vmatpush2.bf16.msra.mxu0 %v1048
    %1381 = vmatprep.subr.bf16.mxu0 %v1045
    %1382 = vmatpush2.bf16.msra.mxu0 %v1044
    %1383 = vmatprep.subr.bf16.mxu0 %v1041
    %1384 = vmatpush2.bf16.msra.mxu0 %v1040
    %1385 = vmatprep.subr.bf16.mxu0 %v1037
    %1386 = vmatpush2.bf16.msra.mxu0 %v1036
    %1387 = vmatprep.subr.bf16.mxu0 %v1033
    %1388 = vmatpush2.bf16.msra.mxu0 %v1032
    %1389 = vmatprep.subr.bf16.mxu0 %v1029
    %1390 = vmatpush2.bf16.msra.mxu0 %v1028
    %1391 = vmatprep.subr.bf16.mxu0 %v1025
    %1392 = vmatpush2.bf16.msra.mxu0 %v1024
    %1393 = vmatprep.subr.bf16.mxu0 %v1021
    %1394 = vmatpush2.bf16.msra.mxu0 %v1020
    %1395 = vmatprep.mubr.bf16.mxu0 %v326
    %1396 = vmatmul.mubr.bf16.gmra.mxu0 %v325
    %v1397 = vpop.f32.mrf.mxu0
    %v1398 = vadd.f32 %v1355, %v1397
    %v1399 = vpop.f32.mrf.mxu0
    %v1400 = vadd.f32 %v1357, %v1399
    %v1401 = vpop.f32.mrf.mxu0
    %v1402 = vadd.f32 %v1359, %v1401
    %v1403 = vpop.f32.mrf.mxu0
    %v1404 = vadd.f32 %v1361, %v1403
    %1405 = vdwg.mxu0
    %1406 = vmatprep.subr.bf16.mxu0 %v1081
    %1407 = vmatpush1.bf16.msra.mxu0 %v1080
    %1408 = vmatprep.subr.bf16.mxu0 %v1077
    %1409 = vmatpush1.bf16.msra.mxu0 %v1076
    %1410 = vmatprep.subr.bf16.mxu0 %v1073
    %1411 = vmatpush1.bf16.msra.mxu0 %v1072
    %1412 = vmatprep.subr.bf16.mxu0 %v1069
    %1413 = vmatpush1.bf16.msra.mxu0 %v1068
    %1414 = vmatprep.subr.bf16.mxu0 %v1065
    %1415 = vmatpush1.bf16.msra.mxu0 %v1064
    %1416 = vmatprep.subr.bf16.mxu0 %v1061
    %1417 = vmatpush1.bf16.msra.mxu0 %v1060
    %1418 = vmatprep.subr.bf16.mxu0 %v1057
    %1419 = vmatpush1.bf16.msra.mxu0 %v1056
    %1420 = vmatprep.subr.bf16.mxu0 %v1053
    %1421 = vmatpush1.bf16.msra.mxu0 %v1052
    %1422 = vmatprep.subr.bf16.mxu0 %v1113
    %1423 = vmatpush2.bf16.msra.mxu0 %v1112
    %1424 = vmatprep.subr.bf16.mxu0 %v1109
    %1425 = vmatpush2.bf16.msra.mxu0 %v1108
    %1426 = vmatprep.subr.bf16.mxu0 %v1105
    %1427 = vmatpush2.bf16.msra.mxu0 %v1104
    %1428 = vmatprep.subr.bf16.mxu0 %v1101
    %1429 = vmatpush2.bf16.msra.mxu0 %v1100
    %1430 = vmatprep.subr.bf16.mxu0 %v1097
    %1431 = vmatpush2.bf16.msra.mxu0 %v1096
    %1432 = vmatprep.subr.bf16.mxu0 %v1093
    %1433 = vmatpush2.bf16.msra.mxu0 %v1092
    %1434 = vmatprep.subr.bf16.mxu0 %v1089
    %1435 = vmatpush2.bf16.msra.mxu0 %v1088
    %1436 = vmatprep.subr.bf16.mxu0 %v1085
    %1437 = vmatpush2.bf16.msra.mxu0 %v1084
    %1438 = vmatprep.mubr.bf16.mxu0 %v328
    %1439 = vmatmul.mubr.bf16.gmra.mxu0 %v327
    %v1440 = vpop.f32.mrf.mxu0
    %v1441 = vadd.f32 %v1398, %v1440
    %v1442 = vpop.f32.mrf.mxu0
    %v1443 = vadd.f32 %v1400, %v1442
    %v1444 = vpop.f32.mrf.mxu0
    %v1445 = vadd.f32 %v1402, %v1444
    %v1446 = vpop.f32.mrf.mxu0
    %v1447 = vadd.f32 %v1404, %v1446
    %1448 = vdwg.mxu0
    %1449 = vmatprep.subr.bf16.mxu0 0
    %1450 = vmatpush1.bf16.msra.mxu0 0
    %1451 = vmatprep.subr.bf16.mxu0 0
    %1452 = vmatpush1.bf16.msra.mxu0 0
    %1453 = vmatprep.subr.bf16.mxu0 0
    %1454 = vmatpush1.bf16.msra.mxu0 0
    %1455 = vmatprep.subr.bf16.mxu0 0
    %1456 = vmatpush1.bf16.msra.mxu0 0
    %1457 = vmatprep.subr.bf16.mxu0 0
    %1458 = vmatpush1.bf16.msra.mxu0 0
    %1459 = vmatprep.subr.bf16.mxu0 0
    %1460 = vmatpush1.bf16.msra.mxu0 0
    %1461 = vmatprep.subr.bf16.mxu0 0
    %1462 = vmatpush1.bf16.msra.mxu0 0
    %1463 = vmatprep.subr.bf16.mxu0 %v1117
    %1464 = vmatpush1.bf16.msra.mxu0 %v1116
    %1465 = vmatprep.subr.bf16.mxu0 0
    %1466 = vmatpush2.bf16.msra.mxu0 0
    %1467 = vmatprep.subr.bf16.mxu0 0
    %1468 = vmatpush2.bf16.msra.mxu0 0
    %1469 = vmatprep.subr.bf16.mxu0 0
    %1470 = vmatpush2.bf16.msra.mxu0 0
    %1471 = vmatprep.subr.bf16.mxu0 0
    %1472 = vmatpush2.bf16.msra.mxu0 0
    %1473 = vmatprep.subr.bf16.mxu0 0
    %1474 = vmatpush2.bf16.msra.mxu0 0
    %1475 = vmatprep.subr.bf16.mxu0 0
    %1476 = vmatpush2.bf16.msra.mxu0 0
    %1477 = vmatprep.subr.bf16.mxu0 0
    %1478 = vmatpush2.bf16.msra.mxu0 0
    %1479 = vmatprep.subr.bf16.mxu0 0
    %1480 = vmatpush2.bf16.msra.mxu0 0
    %1481 = vmatprep.mubr.bf16.mxu0 0
    %1482 = vmatmul.mubr.bf16.gmra.mxu0 %v1318
    %v1483 = vpop.f32.mrf.mxu0
    %v1484 = vadd.f32 %v1441, %v1483
    %v1485 = vpop.f32.mrf.mxu0
    %v1486 = vadd.f32 %v1443, %v1485
    %v1487 = vpop.f32.mrf.mxu0
    %v1488 = vadd.f32 %v1445, %v1487
    %v1489 = vpop.f32.mrf.mxu0
    %v1490 = vadd.f32 %v1447, %v1489
    %1491 = vdwg.mxu0
    %1492 = vmatprep.subr.bf16.mxu0 %v955
    %1493 = vmatpush1.bf16.msra.mxu0 %v954
    %1494 = vmatprep.subr.bf16.mxu0 %v951
    %1495 = vmatpush1.bf16.msra.mxu0 %v950
    %1496 = vmatprep.subr.bf16.mxu0 %v947
    %1497 = vmatpush1.bf16.msra.mxu0 %v946
    %1498 = vmatprep.subr.bf16.mxu0 %v943
    %1499 = vmatpush1.bf16.msra.mxu0 %v942
    %1500 = vmatprep.subr.bf16.mxu0 %v939
    %1501 = vmatpush1.bf16.msra.mxu0 %v938
    %1502 = vmatprep.subr.bf16.mxu0 %v935
    %1503 = vmatpush1.bf16.msra.mxu0 %v934
    %1504 = vmatprep.subr.bf16.mxu0 %v931
    %1505 = vmatpush1.bf16.msra.mxu0 %v930
    %1506 = vmatprep.subr.bf16.mxu0 %v927
    %1507 = vmatpush1.bf16.msra.mxu0 %v926
    %1508 = vmatprep.subr.bf16.mxu0 %v987
    %1509 = vmatpush2.bf16.msra.mxu0 %v986
    %1510 = vmatprep.subr.bf16.mxu0 %v983
    %1511 = vmatpush2.bf16.msra.mxu0 %v982
    %1512 = vmatprep.subr.bf16.mxu0 %v979
    %1513 = vmatpush2.bf16.msra.mxu0 %v978
    %1514 = vmatprep.subr.bf16.mxu0 %v975
    %1515 = vmatpush2.bf16.msra.mxu0 %v974
    %1516 = vmatprep.subr.bf16.mxu0 %v971
    %1517 = vmatpush2.bf16.msra.mxu0 %v970
    %1518 = vmatprep.subr.bf16.mxu0 %v967
    %1519 = vmatpush2.bf16.msra.mxu0 %v966
    %1520 = vmatprep.subr.bf16.mxu0 %v963
    %1521 = vmatpush2.bf16.msra.mxu0 %v962
    %1522 = vmatprep.subr.bf16.mxu0 %v959
    %1523 = vmatpush2.bf16.msra.mxu0 %v958
    %1524 = vmatprep.mubr.bf16.mxu0 %v324
    %1525 = vmatmul.mubr.bf16.gmra.mxu0 %v323
    %v1526 = vpop.f32.mrf.mxu0
    %v1527 = vadd.f32 %v292, %v1526
    %v1528 = vpop.f32.mrf.mxu0
    %v1529 = vadd.f32 %v296, %v1528
    %v1530 = vpop.f32.mrf.mxu0
    %v1531 = vadd.f32 %v292, %v1530
    %v1532 = vpop.f32.mrf.mxu0
    %v1533 = vadd.f32 %v296, %v1532
    %1534 = vdwg.mxu0
    %1535 = vmatprep.subr.bf16.mxu0 %v1019
    %1536 = vmatpush1.bf16.msra.mxu0 %v1018
    %1537 = vmatprep.subr.bf16.mxu0 %v1015
    %1538 = vmatpush1.bf16.msra.mxu0 %v1014
    %1539 = vmatprep.subr.bf16.mxu0 %v1011
    %1540 = vmatpush1.bf16.msra.mxu0 %v1010
    %1541 = vmatprep.subr.bf16.mxu0 %v1007
    %1542 = vmatpush1.bf16.msra.mxu0 %v1006
    %1543 = vmatprep.subr.bf16.mxu0 %v1003
    %1544 = vmatpush1.bf16.msra.mxu0 %v1002
    %1545 = vmatprep.subr.bf16.mxu0 %v999
    %1546 = vmatpush1.bf16.msra.mxu0 %v998
    %1547 = vmatprep.subr.bf16.mxu0 %v995
    %1548 = vmatpush1.bf16.msra.mxu0 %v994
    %1549 = vmatprep.subr.bf16.mxu0 %v991
    %1550 = vmatpush1.bf16.msra.mxu0 %v990
    %1551 = vmatprep.subr.bf16.mxu0 %v1051
    %1552 = vmatpush2.bf16.msra.mxu0 %v1050
    %1553 = vmatprep.subr.bf16.mxu0 %v1047
    %1554 = vmatpush2.bf16.msra.mxu0 %v1046
    %1555 = vmatprep.subr.bf16.mxu0 %v1043
    %1556 = vmatpush2.bf16.msra.mxu0 %v1042
    %1557 = vmatprep.subr.bf16.mxu0 %v1039
    %1558 = vmatpush2.bf16.msra.mxu0 %v1038
    %1559 = vmatprep.subr.bf16.mxu0 %v1035
    %1560 = vmatpush2.bf16.msra.mxu0 %v1034
    %1561 = vmatprep.subr.bf16.mxu0 %v1031
    %1562 = vmatpush2.bf16.msra.mxu0 %v1030
    %1563 = vmatprep.subr.bf16.mxu0 %v1027
    %1564 = vmatpush2.bf16.msra.mxu0 %v1026
    %1565 = vmatprep.subr.bf16.mxu0 %v1023
    %1566 = vmatpush2.bf16.msra.mxu0 %v1022
    %1567 = vmatprep.mubr.bf16.mxu0 %v326
    %1568 = vmatmul.mubr.bf16.gmra.mxu0 %v325
    %v1569 = vpop.f32.mrf.mxu0
    %v1570 = vadd.f32 %v1527, %v1569
    %v1571 = vpop.f32.mrf.mxu0
    %v1572 = vadd.f32 %v1529, %v1571
    %v1573 = vpop.f32.mrf.mxu0
    %v1574 = vadd.f32 %v1531, %v1573
    %v1575 = vpop.f32.mrf.mxu0
    %v1576 = vadd.f32 %v1533, %v1575
    %1577 = vdwg.mxu0
    %1578 = vmatprep.subr.bf16.mxu0 %v1083
    %1579 = vmatpush1.bf16.msra.mxu0 %v1082
    %1580 = vmatprep.subr.bf16.mxu0 %v1079
    %1581 = vmatpush1.bf16.msra.mxu0 %v1078
    %1582 = vmatprep.subr.bf16.mxu0 %v1075
    %1583 = vmatpush1.bf16.msra.mxu0 %v1074
    %1584 = vmatprep.subr.bf16.mxu0 %v1071
    %1585 = vmatpush1.bf16.msra.mxu0 %v1070
    %1586 = vmatprep.subr.bf16.mxu0 %v1067
    %1587 = vmatpush1.bf16.msra.mxu0 %v1066
    %1588 = vmatprep.subr.bf16.mxu0 %v1063
    %1589 = vmatpush1.bf16.msra.mxu0 %v1062
    %1590 = vmatprep.subr.bf16.mxu0 %v1059
    %1591 = vmatpush1.bf16.msra.mxu0 %v1058
    %1592 = vmatprep.subr.bf16.mxu0 %v1055
    %1593 = vmatpush1.bf16.msra.mxu0 %v1054
    %1594 = vmatprep.subr.bf16.mxu0 %v1115
    %1595 = vmatpush2.bf16.msra.mxu0 %v1114
    %1596 = vmatprep.subr.bf16.mxu0 %v1111
    %1597 = vmatpush2.bf16.msra.mxu0 %v1110
    %1598 = vmatprep.subr.bf16.mxu0 %v1107
    %1599 = vmatpush2.bf16.msra.mxu0 %v1106
    %1600 = vmatprep.subr.bf16.mxu0 %v1103
    %1601 = vmatpush2.bf16.msra.mxu0 %v1102
    %1602 = vmatprep.subr.bf16.mxu0 %v1099
    %1603 = vmatpush2.bf16.msra.mxu0 %v1098
    %1604 = vmatprep.subr.bf16.mxu0 %v1095
    %1605 = vmatpush2.bf16.msra.mxu0 %v1094
    %1606 = vmatprep.subr.bf16.mxu0 %v1091
    %1607 = vmatpush2.bf16.msra.mxu0 %v1090
    %1608 = vmatprep.subr.bf16.mxu0 %v1087
    %1609 = vmatpush2.bf16.msra.mxu0 %v1086
    %1610 = vmatprep.mubr.bf16.mxu0 %v328
    %1611 = vmatmul.mubr.bf16.gmra.mxu0 %v327
    %v1612 = vpop.f32.mrf.mxu0
    %v1613 = vadd.f32 %v1570, %v1612
    %v1614 = vpop.f32.mrf.mxu0
    %v1615 = vadd.f32 %v1572, %v1614
    %v1616 = vpop.f32.mrf.mxu0
    %v1617 = vadd.f32 %v1574, %v1616
    %v1618 = vpop.f32.mrf.mxu0
    %v1619 = vadd.f32 %v1576, %v1618
    %1620 = vdwg.mxu0
    %1621 = vmatprep.subr.bf16.mxu0 0
    %1622 = vmatpush1.bf16.msra.mxu0 0
    %1623 = vmatprep.subr.bf16.mxu0 0
    %1624 = vmatpush1.bf16.msra.mxu0 0
    %1625 = vmatprep.subr.bf16.mxu0 0
    %1626 = vmatpush1.bf16.msra.mxu0 0
    %1627 = vmatprep.subr.bf16.mxu0 0
    %1628 = vmatpush1.bf16.msra.mxu0 0
    %1629 = vmatprep.subr.bf16.mxu0 0
    %1630 = vmatpush1.bf16.msra.mxu0 0
    %1631 = vmatprep.subr.bf16.mxu0 0
    %1632 = vmatpush1.bf16.msra.mxu0 0
    %1633 = vmatprep.subr.bf16.mxu0 0
    %1634 = vmatpush1.bf16.msra.mxu0 0
    %1635 = vmatprep.subr.bf16.mxu0 %v1119
    %1636 = vmatpush1.bf16.msra.mxu0 %v1118
    %1637 = vmatprep.subr.bf16.mxu0 0
    %1638 = vmatpush2.bf16.msra.mxu0 0
    %1639 = vmatprep.subr.bf16.mxu0 0
    %1640 = vmatpush2.bf16.msra.mxu0 0
    %1641 = vmatprep.subr.bf16.mxu0 0
    %1642 = vmatpush2.bf16.msra.mxu0 0
    %1643 = vmatprep.subr.bf16.mxu0 0
    %1644 = vmatpush2.bf16.msra.mxu0 0
    %1645 = vmatprep.subr.bf16.mxu0 0
    %1646 = vmatpush2.bf16.msra.mxu0 0
    %1647 = vmatprep.subr.bf16.mxu0 0
    %1648 = vmatpush2.bf16.msra.mxu0 0
    %1649 = vmatprep.subr.bf16.mxu0 0
    %1650 = vmatpush2.bf16.msra.mxu0 0
    %1651 = vmatprep.subr.bf16.mxu0 0
    %1652 = vmatpush2.bf16.msra.mxu0 0
    %1653 = vmatprep.mubr.bf16.mxu0 0
    %1654 = vmatmul.mubr.bf16.gmra.mxu0 %v1318
    %v1655 = vpop.f32.mrf.mxu0
    %v1656 = vadd.f32 %v1613, %v1655
    %v1657 = vpop.f32.mrf.mxu0
    %v1658 = vadd.f32 %v1615, %v1657
    %v1659 = vpop.f32.mrf.mxu0
    %v1660 = vadd.f32 %v1617, %v1659
    %v1661 = vpop.f32.mrf.mxu0
    %v1662 = vadd.f32 %v1619, %v1661
    %1663 = vdwg.mxu0
    %v1664 = vmax.f32 %v1484, 0.0
    %v1665 = vmax.f32 %v1486, 0.0
    %v1666 = vmax.f32 %v1656, 0.0
    %v1667 = vmax.f32 %v1658, 0.0
    %v1668 = vmax.f32 %v1488, 0.0
    %v1669 = vmax.f32 %v1490, 0.0
    %v1670 = vmax.f32 %v1660, 0.0
    %v1671 = vmax.f32 %v1662, 0.0
    %v1672 = vpack.c.bf16 %v1668, %v1664
    %v1673 = vpack.c.bf16 %v1669, %v1665
    %v1674 = vpack.c.bf16 %v1670, %v1666
    %v1675 = vpack.c.bf16 %v1671, %v1667
    %v1676 = vld [vmem:[#allocation8] sm:$0xf]
    %v1677 = vld [vmem:[#allocation8 + $0x4] sm:$0xf]
    %v1678 = vld [vmem:[#allocation8 + $0x8] sm:$0xf]
    %v1679 = vld [vmem:[#allocation8 + $0xc] sm:$0xf]
    %v1680 = vld [vmem:[#allocation8 + $0x10] sm:$0xf]
    %v1681 = vld [vmem:[#allocation8 + $0x14] sm:$0xf]
    %v1682 = vld [vmem:[#allocation8 + $0x18] sm:$0xf]
    %v1683 = vld [vmem:[#allocation8 + $0x1c] sm:$0xf]
    %v1684 = vld [vmem:[#allocation8 + $0x20] sm:$0xf]
    %v1685 = vld [vmem:[#allocation8 + $0x24] sm:$0xf]
    %v1686 = vld [vmem:[#allocation8 + $0x28] sm:$0xf]
    %v1687 = vld [vmem:[#allocation8 + $0x2c] sm:$0xf]
    %v1688 = vld [vmem:[#allocation8 + $0x30] sm:$0xf]
    %v1689 = vld [vmem:[#allocation8 + $0x34] sm:$0xf]
    %v1690 = vld [vmem:[#allocation8 + $0x38] sm:$0xf]
    %v1691 = vld [vmem:[#allocation8 + $0x3c] sm:$0xf]
    %v1692 = vld [vmem:[#allocation8 + $0x40] sm:$0xf]
    %v1693 = vld [vmem:[#allocation8 + $0x44] sm:$0xf]
    %v1694 = vld [vmem:[#allocation8 + $0x48] sm:$0xf]
    %v1695 = vld [vmem:[#allocation8 + $0x4c] sm:$0xf]
    %v1696 = vld [vmem:[#allocation8 + $0x50] sm:$0xf]
    %v1697 = vld [vmem:[#allocation8 + $0x54] sm:$0xf]
    %v1698 = vld [vmem:[#allocation8 + $0x58] sm:$0xf]
    %v1699 = vld [vmem:[#allocation8 + $0x5c] sm:$0xf]
    %v1700 = vld [vmem:[#allocation8 + $0x60] sm:$0xf]
    %v1701 = vld [vmem:[#allocation8 + $0x64] sm:$0xf]
    %v1702 = vld [vmem:[#allocation8 + $0x68] sm:$0xf]
    %v1703 = vld [vmem:[#allocation8 + $0x6c] sm:$0xf]
    %v1704 = vld [vmem:[#allocation8 + $0x70] sm:$0xf]
    %v1705 = vld [vmem:[#allocation8 + $0x74] sm:$0xf]
    %v1706 = vld [vmem:[#allocation8 + $0x78] sm:$0xf]
    %v1707 = vld [vmem:[#allocation8 + $0x7c] sm:$0xf]
    %v1708 = vld [vmem:[#allocation8 + $0x80] sm:$0xf]
    %v1709 = vld [vmem:[#allocation8 + $0x84] sm:$0xf]
    %v1710 = vld [vmem:[#allocation8 + $0x88] sm:$0xf]
    %v1711 = vld [vmem:[#allocation8 + $0x8c] sm:$0xf]
    %v1712 = vld [vmem:[#allocation8 + $0x90] sm:$0xf]
    %v1713 = vld [vmem:[#allocation8 + $0x94] sm:$0xf]
    %v1714 = vld [vmem:[#allocation8 + $0x98] sm:$0xf]
    %v1715 = vld [vmem:[#allocation8 + $0x9c] sm:$0xf]
    %v1716 = vld [vmem:[#allocation8 + $0xa0] sm:$0xf]
    %v1717 = vld [vmem:[#allocation8 + $0xa4] sm:$0xf]
    %v1718 = vld [vmem:[#allocation8 + $0xa8] sm:$0xf]
    %v1719 = vld [vmem:[#allocation8 + $0xac] sm:$0xf]
    %v1720 = vld [vmem:[#allocation8 + $0xb0] sm:$0xf]
    %v1721 = vld [vmem:[#allocation8 + $0xb4] sm:$0xf]
    %v1722 = vld [vmem:[#allocation8 + $0xb8] sm:$0xf]
    %v1723 = vld [vmem:[#allocation8 + $0xbc] sm:$0xf]
    %v1724 = vld [vmem:[#allocation8 + $0xc0] sm:$0xf]
    %v1725 = vld [vmem:[#allocation8 + $0xc4] sm:$0xf]
    %v1726 = vld [vmem:[#allocation8 + $0xc8] sm:$0xf]
    %v1727 = vld [vmem:[#allocation8 + $0xcc] sm:$0xf]
    %v1728 = vld [vmem:[#allocation8 + $0xd0] sm:$0xf]
    %v1729 = vld [vmem:[#allocation8 + $0xd4] sm:$0xf]
    %v1730 = vld [vmem:[#allocation8 + $0xd8] sm:$0xf]
    %v1731 = vld [vmem:[#allocation8 + $0xdc] sm:$0xf]
    %v1732 = vld [vmem:[#allocation8 + $0xe0] sm:$0xf]
    %v1733 = vld [vmem:[#allocation8 + $0xe4] sm:$0xf]
    %v1734 = vld [vmem:[#allocation8 + $0xe8] sm:$0xf]
    %v1735 = vld [vmem:[#allocation8 + $0xec] sm:$0xf]
    %v1736 = vld [vmem:[#allocation8 + $0xf0] sm:$0xf]
    %v1737 = vld [vmem:[#allocation8 + $0xf4] sm:$0xf]
    %v1738 = vld [vmem:[#allocation8 + $0xf8] sm:$0xf]
    %v1739 = vld [vmem:[#allocation8 + $0xfc] sm:$0xf]
    %v1740 = vld [vmem:[%s4] sm:$0x1]
    %v1742 = vlaneseq
    %v1743 = vshrl.u32 %v1742, 7
    %v1744 = vsub.s32 0, %v1743
    %v1745 = vrot.slane %v1740, %v1744
    %v1811 = vunpack.c.l.b16 %v1676
    %v1812 = vunpack.c.l.b16 %v1677
    %v1813 = vunpack.c.l.b16 %v1678
    %v1814 = vunpack.c.l.b16 %v1679
    %v1815 = vunpack.c.l.b16 %v1680
    %v1816 = vunpack.c.l.b16 %v1681
    %v1817 = vunpack.c.l.b16 %v1682
    %v1818 = vunpack.c.l.b16 %v1683
    %v1819 = vunpack.c.l.b16 %v1684
    %v1820 = vunpack.c.l.b16 %v1685
    %v1821 = vunpack.c.l.b16 %v1686
    %v1822 = vunpack.c.l.b16 %v1687
    %v1823 = vunpack.c.l.b16 %v1688
    %v1824 = vunpack.c.l.b16 %v1689
    %v1825 = vunpack.c.l.b16 %v1690
    %v1826 = vunpack.c.l.b16 %v1691
    %v1827 = vunpack.c.l.b16 %v1692
    %v1828 = vunpack.c.l.b16 %v1693
    %v1829 = vunpack.c.l.b16 %v1694
    %v1830 = vunpack.c.l.b16 %v1695
    %v1831 = vunpack.c.l.b16 %v1696
    %v1832 = vunpack.c.l.b16 %v1697
    %v1833 = vunpack.c.l.b16 %v1698
    %v1834 = vunpack.c.l.b16 %v1699
    %v1835 = vunpack.c.l.b16 %v1700
    %v1836 = vunpack.c.l.b16 %v1701
    %v1837 = vunpack.c.l.b16 %v1702
    %v1838 = vunpack.c.l.b16 %v1703
    %v1839 = vunpack.c.l.b16 %v1704
    %v1840 = vunpack.c.l.b16 %v1705
    %v1841 = vunpack.c.l.b16 %v1706
    %v1842 = vunpack.c.l.b16 %v1707
    %v1843 = vunpack.c.l.b16 %v1708
    %v1844 = vunpack.c.l.b16 %v1709
    %v1845 = vunpack.c.l.b16 %v1710
    %v1846 = vunpack.c.l.b16 %v1711
    %v1847 = vunpack.c.l.b16 %v1712
    %v1848 = vunpack.c.l.b16 %v1713
    %v1849 = vunpack.c.l.b16 %v1714
    %v1850 = vunpack.c.l.b16 %v1715
    %v1851 = vunpack.c.l.b16 %v1716
    %v1852 = vunpack.c.l.b16 %v1717
    %v1853 = vunpack.c.l.b16 %v1718
    %v1854 = vunpack.c.l.b16 %v1719
    %v1855 = vunpack.c.l.b16 %v1720
    %v1856 = vunpack.c.l.b16 %v1721
    %v1857 = vunpack.c.l.b16 %v1722
    %v1858 = vunpack.c.l.b16 %v1723
    %v1859 = vunpack.c.l.b16 %v1724
    %v1860 = vunpack.c.l.b16 %v1725
    %v1861 = vunpack.c.l.b16 %v1726
    %v1862 = vunpack.c.l.b16 %v1727
    %v1863 = vunpack.c.l.b16 %v1728
    %v1864 = vunpack.c.l.b16 %v1729
    %v1865 = vunpack.c.l.b16 %v1730
    %v1866 = vunpack.c.l.b16 %v1731
    %v1867 = vunpack.c.l.b16 %v1732
    %v1868 = vunpack.c.l.b16 %v1733
    %v1869 = vunpack.c.l.b16 %v1734
    %v1870 = vunpack.c.l.b16 %v1735
    %v1871 = vunpack.c.l.b16 %v1736
    %v1872 = vunpack.c.l.b16 %v1737
    %v1873 = vunpack.c.l.b16 %v1738
    %v1874 = vunpack.c.l.b16 %v1739
    %v1875 = vpack.c.b16 %v1812, %v1811
    %v1876 = vpack.c.b16 %v1814, %v1813
    %v1877 = vpack.c.b16 %v1816, %v1815
    %v1878 = vpack.c.b16 %v1818, %v1817
    %v1879 = vpack.c.b16 %v1820, %v1819
    %v1880 = vpack.c.b16 %v1822, %v1821
    %v1881 = vpack.c.b16 %v1824, %v1823
    %v1882 = vpack.c.b16 %v1826, %v1825
    %v1883 = vpack.c.b16 %v1828, %v1827
    %v1884 = vpack.c.b16 %v1830, %v1829
    %v1885 = vpack.c.b16 %v1832, %v1831
    %v1886 = vpack.c.b16 %v1834, %v1833
    %v1887 = vpack.c.b16 %v1836, %v1835
    %v1888 = vpack.c.b16 %v1838, %v1837
    %v1889 = vpack.c.b16 %v1840, %v1839
    %v1890 = vpack.c.b16 %v1842, %v1841
    %v1891 = vpack.c.b16 %v1844, %v1843
    %v1892 = vpack.c.b16 %v1846, %v1845
    %v1893 = vpack.c.b16 %v1848, %v1847
    %v1894 = vpack.c.b16 %v1850, %v1849
    %v1895 = vpack.c.b16 %v1852, %v1851
    %v1896 = vpack.c.b16 %v1854, %v1853
    %v1897 = vpack.c.b16 %v1856, %v1855
    %v1898 = vpack.c.b16 %v1858, %v1857
    %v1899 = vpack.c.b16 %v1860, %v1859
    %v1900 = vpack.c.b16 %v1862, %v1861
    %v1901 = vpack.c.b16 %v1864, %v1863
    %v1902 = vpack.c.b16 %v1866, %v1865
    %v1903 = vpack.c.b16 %v1868, %v1867
    %v1904 = vpack.c.b16 %v1870, %v1869
    %v1905 = vpack.c.b16 %v1872, %v1871
    %v1906 = vpack.c.b16 %v1874, %v1873
    %1939 = vmatprep.subr.bf16.mxu0 0
    %1940 = vmatpush1.bf16.msra.mxu0 %v1882
    %1941 = vmatprep.subr.bf16.mxu0 0
    %1942 = vmatpush1.bf16.msra.mxu0 %v1881
    %1943 = vmatprep.subr.bf16.mxu0 0
    %1944 = vmatpush1.bf16.msra.mxu0 %v1880
    %1945 = vmatprep.subr.bf16.mxu0 0
    %1946 = vmatpush1.bf16.msra.mxu0 %v1879
    %1947 = vmatprep.subr.bf16.mxu0 0
    %1948 = vmatpush1.bf16.msra.mxu0 %v1878
    %1949 = vmatprep.subr.bf16.mxu0 0
    %1950 = vmatpush1.bf16.msra.mxu0 %v1877
    %1951 = vmatprep.subr.bf16.mxu0 0
    %1952 = vmatpush1.bf16.msra.mxu0 %v1876
    %1953 = vmatprep.subr.bf16.mxu0 0
    %1954 = vmatpush1.bf16.msra.mxu0 %v1875
    %1955 = vmatprep.subr.bf16.mxu0 0
    %1956 = vmatpush2.bf16.msra.mxu0 %v1890
    %1957 = vmatprep.subr.bf16.mxu0 0
    %1958 = vmatpush2.bf16.msra.mxu0 %v1889
    %1959 = vmatprep.subr.bf16.mxu0 0
    %1960 = vmatpush2.bf16.msra.mxu0 %v1888
    %1961 = vmatprep.subr.bf16.mxu0 0
    %1962 = vmatpush2.bf16.msra.mxu0 %v1887
    %1963 = vmatprep.subr.bf16.mxu0 0
    %1964 = vmatpush2.bf16.msra.mxu0 %v1886
    %1965 = vmatprep.subr.bf16.mxu0 0
    %1966 = vmatpush2.bf16.msra.mxu0 %v1885
    %1967 = vmatprep.subr.bf16.mxu0 0
    %1968 = vmatpush2.bf16.msra.mxu0 %v1884
    %1969 = vmatprep.subr.bf16.mxu0 0
    %1970 = vmatpush2.bf16.msra.mxu0 %v1883
    %1971 = vmatprep.mubr.bf16.mxu0 %v1673
    %1972 = vmatmul.mubr.bf16.gmra.mxu0 %v1672
    %v1973 = vpop.f32.mrf.mxu0
    %v1974 = vadd.f32 %v1745, %v1973
    %v1975 = vpop.f32.mrf.mxu0
    %v1976 = vpop.f32.mrf.mxu0
    %v1977 = vadd.f32 %v1745, %v1976
    %v1978 = vpop.f32.mrf.mxu0
    %1979 = vdwg.mxu0
    %1980 = vmatprep.subr.bf16.mxu0 0
    %1981 = vmatpush1.bf16.msra.mxu0 %v1898
    %1982 = vmatprep.subr.bf16.mxu0 0
    %1983 = vmatpush1.bf16.msra.mxu0 %v1897
    %1984 = vmatprep.subr.bf16.mxu0 0
    %1985 = vmatpush1.bf16.msra.mxu0 %v1896
    %1986 = vmatprep.subr.bf16.mxu0 0
    %1987 = vmatpush1.bf16.msra.mxu0 %v1895
    %1988 = vmatprep.subr.bf16.mxu0 0
    %1989 = vmatpush1.bf16.msra.mxu0 %v1894
    %1990 = vmatprep.subr.bf16.mxu0 0
    %1991 = vmatpush1.bf16.msra.mxu0 %v1893
    %1992 = vmatprep.subr.bf16.mxu0 0
    %1993 = vmatpush1.bf16.msra.mxu0 %v1892
    %1994 = vmatprep.subr.bf16.mxu0 0
    %1995 = vmatpush1.bf16.msra.mxu0 %v1891
    %1996 = vmatprep.subr.bf16.mxu0 0
    %1997 = vmatpush2.bf16.msra.mxu0 %v1906
    %1998 = vmatprep.subr.bf16.mxu0 0
    %1999 = vmatpush2.bf16.msra.mxu0 %v1905
    %2000 = vmatprep.subr.bf16.mxu0 0
    %2001 = vmatpush2.bf16.msra.mxu0 %v1904
    %2002 = vmatprep.subr.bf16.mxu0 0
    %2003 = vmatpush2.bf16.msra.mxu0 %v1903
    %2004 = vmatprep.subr.bf16.mxu0 0
    %2005 = vmatpush2.bf16.msra.mxu0 %v1902
    %2006 = vmatprep.subr.bf16.mxu0 0
    %2007 = vmatpush2.bf16.msra.mxu0 %v1901
    %2008 = vmatprep.subr.bf16.mxu0 0
    %2009 = vmatpush2.bf16.msra.mxu0 %v1900
    %2010 = vmatprep.subr.bf16.mxu0 0
    %2011 = vmatpush2.bf16.msra.mxu0 %v1899
    %2012 = vmatprep.mubr.bf16.mxu0 %v1675
    %2013 = vmatmul.mubr.bf16.gmra.mxu0 %v1674
    %v2014 = vpop.f32.mrf.mxu0
    %v2015 = vadd.f32 %v1974, %v2014
    %v2016 = vpop.f32.mrf.mxu0
    %v2017 = vpop.f32.mrf.mxu0
    %v2018 = vadd.f32 %v1977, %v2017
    %v2019 = vpop.f32.mrf.mxu0
    %2020 = vdwg.mxu0
    %2021 = vst [vmem:[#allocation10] sm:$0xff] %v2015
    %2022 = vst [vmem:[#allocation10 + $0x8] sm:$0xff] %v2018
    // Predicated region
    $region38: #{tpu_custom_call.1} parent=1 // pred_check
      _
    $region39: #{tpu_custom_call.1} parent=1 // pred_check_branch
      %2024 = sbr.rel (0) target = $region41
    $region40: #{tpu_custom_call.1} parent=1 // pred_region
      %s2026 = ssub.s32 256, 256
      %2027 = vsyncadd [#allocation4], %s2026
      %s2028 = sshll.u32 [#allocation10], 4
      %s2029 = int_to_ptr.vmem [resolvable:$true] %s2028
      %2034 = dma.vmem_to_hbm [thread:$0]  %s2029, 256, %s5, [#allocation4], 128, 128, 8
    $region41: #{tpu_custom_call.1} parent=1 // pred_fallthru
      _
    // Predicated region
    $region42: #{tpu_custom_call.1} parent=1 // pred_check
      _
    $region43: #{tpu_custom_call.1} parent=1 // pred_check_branch
      %2036 = sbr.rel (0) target = $region45
    $region44: #{tpu_custom_call.1} parent=1 // pred_region
      %2037 = dma.done [#allocation4], 256
    $region45: #{tpu_custom_call.1} parent=1 // pred_fallthru
      _
    %2038 = vsyncpa [#allocation3], 1
    %2039 = vsyncpa [#allocation6], 1
    %2040 = vsyncpa [#allocation9], 1
    %2041 = vsyncpa [#allocation4], 1

</llo_original>
